<compile_context>
chip_gen: v5e
topology: v5e:2x2
jax: 0.10.0
libtpu: 0.0.40
codegen_flags: <defaults>
</compile_context>

<pallas_src>
import math
from functools import lru_cache

import numpy as np
import jax
import jax.numpy as jnp
from jax.experimental import pallas as pl
from jax.experimental.pallas import tpu as pltpu


# ---------------------------------------------------------------------------
# Fused IDA-step kernel.  Single invocation (no grid); all refs are whole
# arrays in VMEM.  Feature maps are (N*H, W*C) row-dense tiles.
# ---------------------------------------------------------------------------
def _make_ida_kernel(hi, ho):
    def kernel(x_ref, skip_ref,
               gp0_ref, gp1_ref, gp2_ref, mp_ref, sp_ref,
               my_ref, uu_ref,
               gn0_ref, gn1_ref, gn2_ref, mn_ref, sn_ref,
               out_ref):

        def conv3x3_bn_relu(zf, g0_ref, g1_ref, g2_ref, m_ref, s_ref, h):
            # zf: f32 (N*h, W*Cin).  Row (dy) shifts via an XLU sublane roll
            # plus a per-image boundary mask (replaces the old HxH f32 matmuls).
            rows = zf.shape[0]
            r = jax.lax.broadcasted_iota(jnp.int32, (rows, 1), 0) % h
            # pltpu.roll follows jnp.roll semantics: out[i] = in[(i - shift) % rows].
            #   shift = 1        -> z[i-1]   (dy = -1 tap)
            #   shift = rows - 1 -> z[i+1]   (dy = +1 tap; == -1 mod rows)
            zu = jnp.where(r >= 1, pltpu.roll(zf, shift=1, axis=0), 0.0)
            zd = jnp.where(r <= h - 2, pltpu.roll(zf, shift=rows - 1, axis=0), 0.0)
            # Three dy-band bf16 MXU matmuls accumulated in f32 (no 3x-wide
            # concat copy held in VMEM).
            y = jnp.dot(zu.astype(jnp.bfloat16), g0_ref[...],
                        preferred_element_type=jnp.float32)
            y = y + jnp.dot(zf.astype(jnp.bfloat16), g1_ref[...],
                            preferred_element_type=jnp.float32)
            y = y + jnp.dot(zd.astype(jnp.bfloat16), g2_ref[...],
                            preferred_element_type=jnp.float32)
            # mult/shift contain the 0.5 DCNv2 mask factor, conv bias and folded BN.
            return jnp.maximum(y * m_ref[...] + s_ref[...], 0.0)

        # proj DeformConv + BN + ReLU on the lower-resolution input.
        xf = x_ref[...].astype(jnp.float32)                         # (N*Hi, Wi*Ci)
        p = conv3x3_bn_relu(xf, gp0_ref, gp1_ref, gp2_ref, mp_ref, sp_ref, hi)
        # Bilinear 2x upsample (depthwise ConvTranspose2d k=4, s=2, p=1,
        # fill_up_weights): block-diagonal bf16 row matrix, then a bf16 column
        # matrix that emits the interleaved upsampled columns directly.
        t = jnp.dot(my_ref[...], p.astype(jnp.bfloat16),
                    preferred_element_type=jnp.float32)              # (N*Ho, Wi*Co)
        u = jnp.dot(t.astype(jnp.bfloat16), uu_ref[...],
                    preferred_element_type=jnp.float32)              # (N*Ho, Wo*Co)
        # Residual add with the lower pyramid level, then node DeformConv+BN+ReLU.
        z = u + skip_ref[...].astype(jnp.float32)
        y = conv3x3_bn_relu(z, gn0_ref, gn1_ref, gn2_ref, mn_ref, sn_ref, ho)
        out_ref[...] = y.astype(out_ref.dtype)

    return kernel


@lru_cache(maxsize=None)
def _get_ida_call(n, hi, wi, ci, ho, wo, co):
    in_specs = [pl.BlockSpec(memory_space=pltpu.MemorySpace.VMEM)
                for _ in range(14)]
    return pl.pallas_call(
        _make_ida_kernel(hi, ho),
        out_shape=jax.ShapeDtypeStruct((n * ho, wo * co), jnp.bfloat16),
        in_specs=in_specs,
        out_specs=pl.BlockSpec(memory_space=pltpu.MemorySpace.VMEM),
        compiler_params=pltpu.CompilerParams(
            vmem_limit_bytes=32 * 1024 * 1024),
    )


# ---------------------------------------------------------------------------
# Host-side (numpy) parameter folding helpers (cached per shape).
# ---------------------------------------------------------------------------
def make_deform_conv_params(rng, chi, cho):
    """Synthetic ModulatedDeformConvPack(3x3) + BatchNorm2d (eval) parameters."""
    w = (rng.standard_normal((3, 3, chi, cho)) / math.sqrt(9.0 * chi)).astype(np.float32)
    b = (0.1 * rng.standard_normal(cho)).astype(np.float32)
    gamma = (1.0 + 0.1 * rng.standard_normal(cho)).astype(np.float32)
    beta = (0.1 * rng.standard_normal(cho)).astype(np.float32)
    rmean = np.zeros(cho, np.float32)
    rvar = np.ones(cho, np.float32)
    scale = gamma / np.sqrt(rvar + 1e-5)
    return {
        "w": w,                                              # (3, 3, Cin, Cout)
        "mult": (0.5 * scale).astype(np.float32),            # 0.5 = sigmoid(0) mask
        "shift": ((b - rmean) * scale + beta).astype(np.float32),
        "chi": chi,
        "cho": cho,
        "_cache": {},
    }


def _banded_conv_bands(params, width):
    """Per-dy banded (W*Ci, W*Co) bf16 matrices: the 3x3 conv on a row-dense
    (H, W*Ci) tile becomes three MXU matmuls (dy = -1, 0, +1).  dx taps,
    channel mixing and W-direction zero padding are folded in."""
    key = ("g", width)
    if key in params["_cache"]:
        return params["_cache"][key]
    w, ci, co = params["w"], params["chi"], params["cho"]
    bands = []
    for dy in range(3):
        gm = np.zeros((width, ci, width, co), np.float32)
        for dx in range(3):
            for j in range(width):
                jp = j + dx - 1          # input column feeding output column j
                if 0 <= jp < width:
                    gm[jp, :, j, :] = w[dy, dx]
        bands.append(jnp.asarray(gm.reshape(width * ci, width * co), jnp.bfloat16))
    bands = tuple(bands)
    params["_cache"][key] = bands
    return bands


def _bn_rows(params, width):
    key = ("bn", width)
    if key in params["_cache"]:
        return params["_cache"][key]
    m = jnp.asarray(np.tile(params["mult"], width)[None, :], jnp.float32)
    s = jnp.asarray(np.tile(params["shift"], width)[None, :], jnp.float32)
    params["_cache"][key] = (m, s)
    return m, s


@lru_cache(maxsize=None)
def _up_row_matrix(n, h):
    # out row 2i = 0.75*p[i] + 0.25*p[i-1];  2i+1 = 0.75*p[i] + 0.25*p[i+1]
    # block-diagonal over the folded batch dimension; 0.25/0.75 exact in bf16.
    my = np.zeros((2 * h, h), np.float32)
    for i in range(h):
        my[2 * i, i] = 0.75
        if i > 0:
            my[2 * i, i - 1] = 0.25
        my[2 * i + 1, i] = 0.75
        if i + 1 < h:
            my[2 * i + 1, i + 1] = 0.25
    blk = np.kron(np.eye(n, dtype=np.float32), my)       # (N*2h, N*h)
    return jnp.asarray(blk, jnp.bfloat16)


@lru_cache(maxsize=None)
def _up_col_matrix(w, c):
    # out col 2j = 0.75*t[j] + 0.25*t[j-1];  2j+1 = 0.75*t[j] + 0.25*t[j+1]
    eye = np.eye(c, dtype=np.float32)
    um = np.zeros((w, c, 2 * w, c), np.float32)
    for j in range(w):
        um[j, :, 2 * j, :] = 0.75 * eye
        if j > 0:
            um[j - 1, :, 2 * j, :] = 0.25 * eye
        um[j, :, 2 * j + 1, :] = 0.75 * eye
        if j + 1 < w:
            um[j + 1, :, 2 * j + 1, :] = 0.25 * eye
    return jnp.asarray(um.reshape(w * c, 2 * w * c), jnp.bfloat16)


# ---------------------------------------------------------------------------
# One IDA step: layers[i] = node(up(proj(layers[i])) + layers[i-1])
# ---------------------------------------------------------------------------
def ida_step(x, skip, proj, node):
    """x: (N, Hi, Wi, Ci) NHWC, skip: (N, 2Hi, 2Wi, Co) -> (N, 2Hi, 2Wi, Co) bf16."""
    n, hi, wi, ci = x.shape
    _, ho, wo, co = skip.shape
    assert ho == 2 * hi and wo == 2 * wi
    assert proj["chi"] == ci and proj["cho"] == co
    assert node["chi"] == co and node["cho"] == co

    # Fold batch into the matmul M dimension (free row-major collapse).
    x2 = x.reshape(n * hi, wi * ci).astype(jnp.bfloat16)
    s2 = skip.reshape(n * ho, wo * co).astype(jnp.bfloat16)

    gp0, gp1, gp2 = _banded_conv_bands(proj, wi)   # each (Wi*Ci, Wi*Co) bf16
    gn0, gn1, gn2 = _banded_conv_bands(node, wo)   # each (Wo*Co, Wo*Co) bf16
    mp, sp = _bn_rows(proj, wi)                    # (1, Wi*Co) f32
    mn, sn = _bn_rows(node, wo)                    # (1, Wo*Co) f32
    my = _up_row_matrix(n, hi)                     # (N*Ho, N*Hi) bf16 block-diag
    uu = _up_col_matrix(wi, co)                    # (Wi*Co, Wo*Co) bf16

    call = _get_ida_call(n, hi, wi, ci, ho, wo, co)
    out = call(x2, s2, gp0, gp1, gp2, mp, sp, my, uu, gn0, gn1, gn2, mn, sn)
    return out.reshape(n, ho, wo, co)


# ---------------------------------------------------------------------------
# DLAUp wrapper (mirrors the PyTorch control flow; NCHW in / NCHW out).
# ---------------------------------------------------------------------------
class DLAUpPallas:
    def __init__(self, seed, startp, channels, scales):
        self.startp = startp
        rng = np.random.RandomState(seed)
        channels = list(channels)
        in_channels = list(channels)
        scales = np.array(scales, dtype=int)
        self.idas = []
        for i in range(len(channels) - 1):
            j = -i - 2
            o = channels[j]
            ida_ch = list(in_channels[j:])
            up_f = [int(v) for v in (scales[j:] // scales[j])]
            ida = {"up_f": up_f}
            for k in range(1, len(ida_ch)):
                ida[f"proj_{k}"] = make_deform_conv_params(rng, ida_ch[k], o)
                ida[f"node_{k}"] = make_deform_conv_params(rng, o, o)
            self.idas.append(ida)
            scales[j + 1:] = scales[j]
            in_channels[j + 1:] = [channels[j] for _ in channels[j + 1:]]

    def _ida_forward(self, ida, layers, startp, endp):
        for i in range(startp + 1, endp):
            m = i - startp
            assert ida["up_f"][m] == 2, "DLAUp only instantiates f=2 upsamplers"
            layers[i] = ida_step(layers[i], layers[i - 1],
                                 ida[f"proj_{m}"], ida[f"node_{m}"])

    def __call__(self, layers_nchw):
        # Activations are handed between IDA steps in bf16; final outputs in f32.
        layers = [jnp.transpose(x, (0, 2, 3, 1)).astype(jnp.bfloat16)
                  for x in layers_nchw]
        out = [layers[-1]]
        n = len(layers)
        for i in range(n - self.startp - 1):
            self._ida_forward(self.idas[i], layers, n - i - 2, n)
            out.insert(0, layers[-1])
        return [jnp.transpose(x, (0, 3, 1, 2)).astype(jnp.float32)
                for x in out]                                   # back to NCHW


if __name__ == "__main__":
    key = jax.random.PRNGKey(0)
    N = 2
    channels = [8, 16, 32]
    scales = [1, 2, 4]
    startp = 0
    base = 32

    keys = jax.random.split(key, len(channels))
    layers = [
        jax.random.normal(
            keys[i],
            (N, channels[i], base // scales[i], base // scales[i]),
            jnp.float32,
        )
        for i in range(len(channels))
    ]

    model = DLAUpPallas(0, startp, channels, scales)
    outs = model(layers)
    outs = jax.block_until_ready(outs)

    assert outs[0].shape == (N, 8, 32, 32)
    assert outs[1].shape == (N, 16, 16, 16)
    assert outs[2].shape == (N, 32, 8, 8)
    assert all(bool(jnp.all(jnp.isfinite(o))) for o in outs)
    print("KERNEL_OK")
</pallas_src>

<mosaic_0001>
module attributes {stable_mosaic.version = 11 : i64} {
  func.func @kernel(%arg0: memref<16x256xbf16, #tpu.memory_space<vmem>>, %arg1: memref<32x256xbf16, #tpu.memory_space<vmem>>, %arg2: memref<256x128xbf16, #tpu.memory_space<vmem>>, %arg3: memref<256x128xbf16, #tpu.memory_space<vmem>>, %arg4: memref<256x128xbf16, #tpu.memory_space<vmem>>, %arg5: memref<1x128xf32, #tpu.memory_space<vmem>>, %arg6: memref<1x128xf32, #tpu.memory_space<vmem>>, %arg7: memref<32x16xbf16, #tpu.memory_space<vmem>>, %arg8: memref<128x256xbf16, #tpu.memory_space<vmem>>, %arg9: memref<256x256xbf16, #tpu.memory_space<vmem>>, %arg10: memref<256x256xbf16, #tpu.memory_space<vmem>>, %arg11: memref<256x256xbf16, #tpu.memory_space<vmem>>, %arg12: memref<1x256xf32, #tpu.memory_space<vmem>>, %arg13: memref<1x256xf32, #tpu.memory_space<vmem>>, %arg14: memref<32x256xbf16, #tpu.memory_space<vmem>>) attributes {dimension_semantics = [], scalar_prefetch = 0 : i64, scratch_operands = 0 : i64, tpu.core_type = #tpu.core_type<tc>} {
    %c0 = arith.constant 0 : index
    %c0_0 = arith.constant 0 : index
    %0 = vector.load %arg0[%c0, %c0_0] : memref<16x256xbf16, #tpu.memory_space<vmem>>, vector<16x256xbf16>
    %1 = arith.extf %0 : vector<16x256xbf16> to vector<16x256xf32>
    %2 = tpu.iota {dimensions = array<i32: 0>} : vector<16x1xi32>
    %c8_i32 = arith.constant 8 : i32
    %c0_i32 = arith.constant 0 : i32
    %3 = arith.cmpi eq, %c8_i32, %c0_i32 : i32
    %c1_i32 = arith.constant 1 : i32
    %4 = arith.select %3, %c1_i32, %c8_i32 : i32
    %5 = vector.broadcast %4 : i32 to vector<16x1xi32>
    %6 = arith.remsi %2, %5 : vector<16x1xi32>
    %c0_i32_1 = arith.constant 0 : i32
    %7 = vector.broadcast %c0_i32_1 : i32 to vector<16x1xi32>
    %8 = arith.cmpi ne, %6, %7 : vector<16x1xi32>
    %c0_i32_2 = arith.constant 0 : i32
    %9 = vector.broadcast %c0_i32_2 : i32 to vector<16x1xi32>
    %10 = arith.cmpi slt, %6, %9 : vector<16x1xi32>
    %c0_i32_3 = arith.constant 0 : i32
    %11 = arith.cmpi slt, %4, %c0_i32_3 : i32
    %12 = vector.broadcast %11 : i1 to vector<16x1xi1>
    %13 = vector.broadcast %12 : vector<16x1xi1> to vector<16x1xi1>
    %14 = arith.xori %10, %13 : vector<16x1xi1>
    %15 = arith.andi %14, %8 : vector<16x1xi1>
    %16 = vector.broadcast %4 : i32 to vector<16x1xi32>
    %17 = arith.addi %6, %16 : vector<16x1xi32>
    %18 = arith.select %15, %17, %6 : vector<16x1xi1>, vector<16x1xi32>
    %c1_i32_4 = arith.constant 1 : i32
    %19 = vector.broadcast %c1_i32_4 : i32 to vector<16x1xi32>
    %20 = arith.cmpi sge, %18, %19 : vector<16x1xi32>
    %c1_i32_5 = arith.constant 1 : i32
    %21 = tpu.dynamic_rotate %1 by %c1_i32_5 dim 0 : vector<16x256xf32>, i32 -> vector<16x256xf32>
    %cst = arith.constant 0.000000e+00 : f32
    %22 = vector.shape_cast %20 : vector<16x1xi1> to vector<16x1xi1>
    %23 = vector.broadcast %22 : vector<16x1xi1> to vector<16x256xi1>
    %24 = vector.broadcast %cst : f32 to vector<16x256xf32>
    %25 = arith.select %23, %21, %24 : vector<16x256xi1>, vector<16x256xf32>
    %c6_i32 = arith.constant 6 : i32
    %26 = vector.broadcast %c6_i32 : i32 to vector<16x1xi32>
    %27 = arith.cmpi sle, %18, %26 : vector<16x1xi32>
    %c15_i32 = arith.constant 15 : i32
    %28 = tpu.dynamic_rotate %1 by %c15_i32 dim 0 : vector<16x256xf32>, i32 -> vector<16x256xf32>
    %cst_6 = arith.constant 0.000000e+00 : f32
    %29 = vector.shape_cast %27 : vector<16x1xi1> to vector<16x1xi1>
    %30 = vector.broadcast %29 : vector<16x1xi1> to vector<16x256xi1>
    %31 = vector.broadcast %cst_6 : f32 to vector<16x256xf32>
    %32 = arith.select %30, %28, %31 : vector<16x256xi1>, vector<16x256xf32>
    %33 = arith.truncf %25 : vector<16x256xf32> to vector<16x256xbf16>
    %c0_7 = arith.constant 0 : index
    %c0_8 = arith.constant 0 : index
    %34 = vector.load %arg2[%c0_7, %c0_8] : memref<256x128xbf16, #tpu.memory_space<vmem>>, vector<256x128xbf16>
    %cst_9 = arith.constant dense<0.000000e+00> : vector<16x128xf32>
    %35 = tpu.matmul %33, %34, %cst_9 {dimension_numbers = #tpu.dot_dimension_numbers<[1], [0], [0], [1], [0, 0, 1, 1], [], []>} : vector<16x256xbf16>, vector<256x128xbf16>, vector<16x128xf32> -> vector<16x128xf32>
    %36 = arith.truncf %1 : vector<16x256xf32> to vector<16x256xbf16>
    %c0_10 = arith.constant 0 : index
    %c0_11 = arith.constant 0 : index
    %37 = vector.load %arg3[%c0_10, %c0_11] : memref<256x128xbf16, #tpu.memory_space<vmem>>, vector<256x128xbf16>
    %cst_12 = arith.constant dense<0.000000e+00> : vector<16x128xf32>
    %38 = tpu.matmul %36, %37, %cst_12 {dimension_numbers = #tpu.dot_dimension_numbers<[1], [0], [0], [1], [0, 0, 1, 1], [], []>} : vector<16x256xbf16>, vector<256x128xbf16>, vector<16x128xf32> -> vector<16x128xf32>
    %39 = arith.addf %35, %38 : vector<16x128xf32>
    %40 = arith.truncf %32 : vector<16x256xf32> to vector<16x256xbf16>
    %c0_13 = arith.constant 0 : index
    %c0_14 = arith.constant 0 : index
    %41 = vector.load %arg4[%c0_13, %c0_14] : memref<256x128xbf16, #tpu.memory_space<vmem>>, vector<256x128xbf16>
    %cst_15 = arith.constant dense<0.000000e+00> : vector<16x128xf32>
    %42 = tpu.matmul %40, %41, %cst_15 {dimension_numbers = #tpu.dot_dimension_numbers<[1], [0], [0], [1], [0, 0, 1, 1], [], []>} : vector<16x256xbf16>, vector<256x128xbf16>, vector<16x128xf32> -> vector<16x128xf32>
    %43 = arith.addf %39, %42 : vector<16x128xf32>
    %c0_16 = arith.constant 0 : index
    %c0_17 = arith.constant 0 : index
    %44 = vector.load %arg5[%c0_16, %c0_17] : memref<1x128xf32, #tpu.memory_space<vmem>>, vector<1x128xf32>
    %45 = vector.broadcast %44 : vector<1x128xf32> to vector<16x128xf32>
    %46 = arith.mulf %43, %45 : vector<16x128xf32>
    %c0_18 = arith.constant 0 : index
    %c0_19 = arith.constant 0 : index
    %47 = vector.load %arg6[%c0_18, %c0_19] : memref<1x128xf32, #tpu.memory_space<vmem>>, vector<1x128xf32>
    %48 = vector.broadcast %47 : vector<1x128xf32> to vector<16x128xf32>
    %49 = arith.addf %46, %48 : vector<16x128xf32>
    %cst_20 = arith.constant 0.000000e+00 : f32
    %50 = vector.broadcast %cst_20 : f32 to vector<16x128xf32>
    %51 = arith.maximumf %49, %50 : vector<16x128xf32>
    %c0_21 = arith.constant 0 : index
    %c0_22 = arith.constant 0 : index
    %52 = vector.load %arg7[%c0_21, %c0_22] : memref<32x16xbf16, #tpu.memory_space<vmem>>, vector<32x16xbf16>
    %53 = arith.truncf %51 : vector<16x128xf32> to vector<16x128xbf16>
    %cst_23 = arith.constant dense<0.000000e+00> : vector<32x128xf32>
    %54 = tpu.matmul %52, %53, %cst_23 {dimension_numbers = #tpu.dot_dimension_numbers<[1], [0], [0], [1], [0, 0, 1, 1], [], []>} : vector<32x16xbf16>, vector<16x128xbf16>, vector<32x128xf32> -> vector<32x128xf32>
    %55 = arith.truncf %54 : vector<32x128xf32> to vector<32x128xbf16>
    %c0_24 = arith.constant 0 : index
    %c0_25 = arith.constant 0 : index
    %56 = vector.load %arg8[%c0_24, %c0_25] : memref<128x256xbf16, #tpu.memory_space<vmem>>, vector<128x256xbf16>
    %cst_26 = arith.constant dense<0.000000e+00> : vector<32x256xf32>
    %57 = tpu.matmul %55, %56, %cst_26 {dimension_numbers = #tpu.dot_dimension_numbers<[1], [0], [0], [1], [0, 0, 1, 1], [], []>} : vector<32x128xbf16>, vector<128x256xbf16>, vector<32x256xf32> -> vector<32x256xf32>
    %c0_27 = arith.constant 0 : index
    %c0_28 = arith.constant 0 : index
    %58 = vector.load %arg1[%c0_27, %c0_28] : memref<32x256xbf16, #tpu.memory_space<vmem>>, vector<32x256xbf16>
    %59 = arith.extf %58 : vector<32x256xbf16> to vector<32x256xf32>
    %60 = arith.addf %57, %59 : vector<32x256xf32>
    %61 = tpu.iota {dimensions = array<i32: 0>} : vector<32x1xi32>
    %c16_i32 = arith.constant 16 : i32
    %c0_i32_29 = arith.constant 0 : i32
    %62 = arith.cmpi eq, %c16_i32, %c0_i32_29 : i32
    %c1_i32_30 = arith.constant 1 : i32
    %63 = arith.select %62, %c1_i32_30, %c16_i32 : i32
    %64 = vector.broadcast %63 : i32 to vector<32x1xi32>
    %65 = arith.remsi %61, %64 : vector<32x1xi32>
    %c0_i32_31 = arith.constant 0 : i32
    %66 = vector.broadcast %c0_i32_31 : i32 to vector<32x1xi32>
    %67 = arith.cmpi ne, %65, %66 : vector<32x1xi32>
    %c0_i32_32 = arith.constant 0 : i32
    %68 = vector.broadcast %c0_i32_32 : i32 to vector<32x1xi32>
    %69 = arith.cmpi slt, %65, %68 : vector<32x1xi32>
    %c0_i32_33 = arith.constant 0 : i32
    %70 = arith.cmpi slt, %63, %c0_i32_33 : i32
    %71 = vector.broadcast %70 : i1 to vector<32x1xi1>
    %72 = vector.broadcast %71 : vector<32x1xi1> to vector<32x1xi1>
    %73 = arith.xori %69, %72 : vector<32x1xi1>
    %74 = arith.andi %73, %67 : vector<32x1xi1>
    %75 = vector.broadcast %63 : i32 to vector<32x1xi32>
    %76 = arith.addi %65, %75 : vector<32x1xi32>
    %77 = arith.select %74, %76, %65 : vector<32x1xi1>, vector<32x1xi32>
    %c1_i32_34 = arith.constant 1 : i32
    %78 = vector.broadcast %c1_i32_34 : i32 to vector<32x1xi32>
    %79 = arith.cmpi sge, %77, %78 : vector<32x1xi32>
    %c1_i32_35 = arith.constant 1 : i32
    %80 = tpu.dynamic_rotate %60 by %c1_i32_35 dim 0 : vector<32x256xf32>, i32 -> vector<32x256xf32>
    %cst_36 = arith.constant 0.000000e+00 : f32
    %81 = vector.shape_cast %79 : vector<32x1xi1> to vector<32x1xi1>
    %82 = vector.broadcast %81 : vector<32x1xi1> to vector<32x256xi1>
    %83 = vector.broadcast %cst_36 : f32 to vector<32x256xf32>
    %84 = arith.select %82, %80, %83 : vector<32x256xi1>, vector<32x256xf32>
    %c14_i32 = arith.constant 14 : i32
    %85 = vector.broadcast %c14_i32 : i32 to vector<32x1xi32>
    %86 = arith.cmpi sle, %77, %85 : vector<32x1xi32>
    %c31_i32 = arith.constant 31 : i32
    %87 = tpu.dynamic_rotate %60 by %c31_i32 dim 0 : vector<32x256xf32>, i32 -> vector<32x256xf32>
    %cst_37 = arith.constant 0.000000e+00 : f32
    %88 = vector.shape_cast %86 : vector<32x1xi1> to vector<32x1xi1>
    %89 = vector.broadcast %88 : vector<32x1xi1> to vector<32x256xi1>
    %90 = vector.broadcast %cst_37 : f32 to vector<32x256xf32>
    %91 = arith.select %89, %87, %90 : vector<32x256xi1>, vector<32x256xf32>
    %92 = arith.truncf %84 : vector<32x256xf32> to vector<32x256xbf16>
    %c0_38 = arith.constant 0 : index
    %c0_39 = arith.constant 0 : index
    %93 = vector.load %arg9[%c0_38, %c0_39] : memref<256x256xbf16, #tpu.memory_space<vmem>>, vector<256x256xbf16>
    %cst_40 = arith.constant dense<0.000000e+00> : vector<32x256xf32>
    %94 = tpu.matmul %92, %93, %cst_40 {dimension_numbers = #tpu.dot_dimension_numbers<[1], [0], [0], [1], [0, 0, 1, 1], [], []>} : vector<32x256xbf16>, vector<256x256xbf16>, vector<32x256xf32> -> vector<32x256xf32>
    %95 = arith.truncf %60 : vector<32x256xf32> to vector<32x256xbf16>
    %c0_41 = arith.constant 0 : index
    %c0_42 = arith.constant 0 : index
    %96 = vector.load %arg10[%c0_41, %c0_42] : memref<256x256xbf16, #tpu.memory_space<vmem>>, vector<256x256xbf16>
    %cst_43 = arith.constant dense<0.000000e+00> : vector<32x256xf32>
    %97 = tpu.matmul %95, %96, %cst_43 {dimension_numbers = #tpu.dot_dimension_numbers<[1], [0], [0], [1], [0, 0, 1, 1], [], []>} : vector<32x256xbf16>, vector<256x256xbf16>, vector<32x256xf32> -> vector<32x256xf32>
    %98 = arith.addf %94, %97 : vector<32x256xf32>
    %99 = arith.truncf %91 : vector<32x256xf32> to vector<32x256xbf16>
    %c0_44 = arith.constant 0 : index
    %c0_45 = arith.constant 0 : index
    %100 = vector.load %arg11[%c0_44, %c0_45] : memref<256x256xbf16, #tpu.memory_space<vmem>>, vector<256x256xbf16>
    %cst_46 = arith.constant dense<0.000000e+00> : vector<32x256xf32>
    %101 = tpu.matmul %99, %100, %cst_46 {dimension_numbers = #tpu.dot_dimension_numbers<[1], [0], [0], [1], [0, 0, 1, 1], [], []>} : vector<32x256xbf16>, vector<256x256xbf16>, vector<32x256xf32> -> vector<32x256xf32>
    %102 = arith.addf %98, %101 : vector<32x256xf32>
    %c0_47 = arith.constant 0 : index
    %c0_48 = arith.constant 0 : index
    %103 = vector.load %arg12[%c0_47, %c0_48] : memref<1x256xf32, #tpu.memory_space<vmem>>, vector<1x256xf32>
    %104 = vector.broadcast %103 : vector<1x256xf32> to vector<32x256xf32>
    %105 = arith.mulf %102, %104 : vector<32x256xf32>
    %c0_49 = arith.constant 0 : index
    %c0_50 = arith.constant 0 : index
    %106 = vector.load %arg13[%c0_49, %c0_50] : memref<1x256xf32, #tpu.memory_space<vmem>>, vector<1x256xf32>
    %107 = vector.broadcast %106 : vector<1x256xf32> to vector<32x256xf32>
    %108 = arith.addf %105, %107 : vector<32x256xf32>
    %cst_51 = arith.constant 0.000000e+00 : f32
    %109 = vector.broadcast %cst_51 : f32 to vector<32x256xf32>
    %110 = arith.maximumf %108, %109 : vector<32x256xf32>
    %111 = arith.truncf %110 : vector<32x256xf32> to vector<32x256xbf16>
    %c0_52 = arith.constant 0 : index
    %c0_53 = arith.constant 0 : index
    %112 = vector.load %arg14[%c0_52, %c0_53] : memref<32x256xbf16, #tpu.memory_space<vmem>>, vector<32x256xbf16>
    tpu.vector_store %arg14[%c0_52, %c0_53], %111 {strides = array<i32>} : memref<32x256xbf16, #tpu.memory_space<vmem>>, vector<32x256xbf16>,
    return
  }
}

</mosaic_0001>

<llo_original>
// kernel: tpu_custom_call.1
$region0: #{tpu_custom_call.1}
  #allocation0 [shape = 'u32[]', space=smem, size = 0x4, offset = 0x4, fixed_abs, tag = 'smem constant byte address 0x4 - core index']
  #allocation1 [shape = 'u32[72,128]{1,0:T(1,128)}', space=vmem, size = 0x9000, scoped, tag = 'internal scratch']
  %s0 = inlined_call_operand.vmem [shape: bf16[16,256], index: 0, kind: input, shape index: {}]
  %s1 = inlined_call_operand.hbm [shape: bf16[32,256], index: 1, kind: input, shape index: {}]
  %s2 = inlined_call_operand.hbm [shape: bf16[256,128], index: 2, kind: input, shape index: {}]
  %s3 = inlined_call_operand.hbm [shape: bf16[256,128], index: 3, kind: input, shape index: {}]
  %s4 = inlined_call_operand.hbm [shape: bf16[256,128], index: 4, kind: input, shape index: {}]
  %s5 = inlined_call_operand.vmem [shape: f32[1,128], index: 5, kind: input, shape index: {}]
  %s6 = inlined_call_operand.vmem [shape: f32[1,128], index: 6, kind: input, shape index: {}]
  %s7 = inlined_call_operand.vmem [shape: bf16[32,16], index: 7, kind: input, shape index: {}]
  %s8 = inlined_call_operand.hbm [shape: bf16[128,256], index: 8, kind: input, shape index: {}]
  %s9 = inlined_call_operand.hbm [shape: bf16[256,256], index: 9, kind: input, shape index: {}]
  %s10 = inlined_call_operand.hbm [shape: bf16[256,256], index: 10, kind: input, shape index: {}]
  %s11 = inlined_call_operand.hbm [shape: bf16[256,256], index: 11, kind: input, shape index: {}]
  %s12 = inlined_call_operand.vmem [shape: f32[1,256], index: 12, kind: input, shape index: {}]
  %s13 = inlined_call_operand.vmem [shape: f32[1,256], index: 13, kind: input, shape index: {}]
  %s14 = inlined_call_operand.hbm [shape: bf16[32,256], index: 14, kind: output, shape index: {}]
  %s15 = sld [smem:[#allocation0]]
  $region98: #{tpu_custom_call.1} parent=0
    _
  %s17 = ssub.s32 1, %s15
  %s18 = scalar_select 0, %s17, %s15
  $region1: #{tpu_custom_call.1} parent=0
    #allocation2 [shape = 'u8[16384]{0}', space=vmem, size = 0x4000, scoped, tag = 'input window, operand 1, single buffered']
    #allocation3 [shape = 's32[1]{0}', space=sflag, size = 0x4, scoped, tag = 'scoped memory for tpu_custom_call.1']
    #allocation4 [shape = 's32[1]{0}', space=sflag, size = 0x4, scoped, tag = 'scoped memory for tpu_custom_call.1']
    #allocation5 [shape = 'u8[65536]{0}', space=vmem, size = 0x10000, scoped, tag = 'input window, operand 2, single buffered']
    #allocation6 [shape = 's32[1]{0}', space=sflag, size = 0x4, scoped, tag = 'scoped memory for tpu_custom_call.1']
    #allocation7 [shape = 'u8[65536]{0}', space=vmem, size = 0x10000, scoped, tag = 'input window, operand 3, single buffered']
    #allocation8 [shape = 'u8[65536]{0}', space=vmem, size = 0x10000, scoped, tag = 'input window, operand 4, single buffered']
    #allocation9 [shape = 's32[1]{0}', space=sflag, size = 0x4, scoped, tag = 'scoped memory for tpu_custom_call.1']
    #allocation10 [shape = 'u8[65536]{0}', space=vmem, size = 0x10000, scoped, tag = 'input window, operand 8, single buffered']
    #allocation11 [shape = 'u8[131072]{0}', space=vmem, size = 0x20000, scoped, tag = 'input window, operand 9, single buffered']
    #allocation12 [shape = 's32[1]{0}', space=sflag, size = 0x4, scoped, tag = 'scoped memory for tpu_custom_call.1']
    #allocation13 [shape = 'u8[131072]{0}', space=vmem, size = 0x20000, scoped, tag = 'input window, operand 10, single buffered']
    #allocation14 [shape = 'u8[131072]{0}', space=vmem, size = 0x20000, scoped, tag = 'input window, operand 11, single buffered']
    #allocation15 [shape = 's32[1]{0}', space=sflag, size = 0x4, scoped, tag = 'scoped memory for tpu_custom_call.1']
    #allocation16 [shape = 'u8[16384]{0}', space=vmem, size = 0x4000, scoped, tag = 'output window, operand 0, single buffered']
    %19 = vsyncpa [#allocation3], 0
    %20 = vsyncpa [#allocation6], 0
    %21 = vsyncpa [#allocation9], 0
    %22 = vsyncpa [#allocation12], 0
    %23 = vsyncpa [#allocation15], 0
    %24 = vsyncpa [#allocation4], 0
    // Predicated region
    $region2: #{tpu_custom_call.1} parent=1 // pred_check
      _
    $region3: #{tpu_custom_call.1} parent=1 // pred_check_branch
      %26 = sbr.rel (0) target = $region5
    $region4: #{tpu_custom_call.1} parent=1 // pred_region
      _
    $region5: #{tpu_custom_call.1} parent=1 // pred_fallthru
      _
    // Predicated region
    $region6: #{tpu_custom_call.1} parent=1 // pred_check
      _
    $region7: #{tpu_custom_call.1} parent=1 // pred_check_branch
      %28 = sbr.rel (0) target = $region9
    $region8: #{tpu_custom_call.1} parent=1 // pred_region
      %30 = vsyncadd [#allocation3], 0
      %s31 = sshll.u32 %s1, 4
      %s32 = int_to_ptr.hbm [resolvable:$true] %s31
      %s33 = sshll.u32 [#allocation2], 4
      %s34 = int_to_ptr.vmem [resolvable:$true] %s33
      %39 = dma.hbm_to_vmem [thread:$0]  %s32, 512, %s34, [#allocation3], 128, 128, 8
    $region9: #{tpu_custom_call.1} parent=1 // pred_fallthru
      _
    // Predicated region
    $region10: #{tpu_custom_call.1} parent=1 // pred_check
      _
    $region11: #{tpu_custom_call.1} parent=1 // pred_check_branch
      %41 = sbr.rel (0) target = $region13
    $region12: #{tpu_custom_call.1} parent=1 // pred_region
      %43 = vsyncadd [#allocation6], 0
      %s44 = sshll.u32 %s2, 4
      %s45 = int_to_ptr.hbm [resolvable:$true] %s44
      %s46 = sshll.u32 [#allocation5], 4
      %s47 = int_to_ptr.vmem [resolvable:$true] %s46
      %52 = dma.hbm_to_vmem [thread:$0]  %s45, 2048, %s47, [#allocation6], 64, 64, 4
    $region13: #{tpu_custom_call.1} parent=1 // pred_fallthru
      _
    // Predicated region
    $region14: #{tpu_custom_call.1} parent=1 // pred_check
      _
    $region15: #{tpu_custom_call.1} parent=1 // pred_check_branch
      %54 = sbr.rel (0) target = $region17
    $region16: #{tpu_custom_call.1} parent=1 // pred_region
      %56 = vsyncadd [#allocation6], 0
      %s57 = sshll.u32 %s3, 4
      %s58 = int_to_ptr.hbm [resolvable:$true] %s57
      %s59 = sshll.u32 [#allocation7], 4
      %s60 = int_to_ptr.vmem [resolvable:$true] %s59
      %65 = dma.hbm_to_vmem [thread:$0]  %s58, 2048, %s60, [#allocation6], 64, 64, 4
    $region17: #{tpu_custom_call.1} parent=1 // pred_fallthru
      _
    // Predicated region
    $region18: #{tpu_custom_call.1} parent=1 // pred_check
      _
    $region19: #{tpu_custom_call.1} parent=1 // pred_check_branch
      %67 = sbr.rel (0) target = $region21
    $region20: #{tpu_custom_call.1} parent=1 // pred_region
      %69 = vsyncadd [#allocation9], 0
      %s70 = sshll.u32 %s4, 4
      %s71 = int_to_ptr.hbm [resolvable:$true] %s70
      %s72 = sshll.u32 [#allocation8], 4
      %s73 = int_to_ptr.vmem [resolvable:$true] %s72
      %78 = dma.hbm_to_vmem [thread:$0]  %s71, 2048, %s73, [#allocation9], 64, 64, 4
    $region21: #{tpu_custom_call.1} parent=1 // pred_fallthru
      _
    // Predicated region
    $region22: #{tpu_custom_call.1} parent=1 // pred_check
      _
    $region23: #{tpu_custom_call.1} parent=1 // pred_check_branch
      %80 = sbr.rel (0) target = $region25
    $region24: #{tpu_custom_call.1} parent=1 // pred_region
      _
    $region25: #{tpu_custom_call.1} parent=1 // pred_fallthru
      _
    // Predicated region
    $region26: #{tpu_custom_call.1} parent=1 // pred_check
      _
    $region27: #{tpu_custom_call.1} parent=1 // pred_check_branch
      %82 = sbr.rel (0) target = $region29
    $region28: #{tpu_custom_call.1} parent=1 // pred_region
      _
    $region29: #{tpu_custom_call.1} parent=1 // pred_fallthru
      _
    // Predicated region
    $region30: #{tpu_custom_call.1} parent=1 // pred_check
      _
    $region31: #{tpu_custom_call.1} parent=1 // pred_check_branch
      %84 = sbr.rel (0) target = $region33
    $region32: #{tpu_custom_call.1} parent=1 // pred_region
      _
    $region33: #{tpu_custom_call.1} parent=1 // pred_fallthru
      _
    // Predicated region
    $region34: #{tpu_custom_call.1} parent=1 // pred_check
      _
    $region35: #{tpu_custom_call.1} parent=1 // pred_check_branch
      %86 = sbr.rel (0) target = $region37
    $region36: #{tpu_custom_call.1} parent=1 // pred_region
      %88 = vsyncadd [#allocation9], 0
      %s89 = sshll.u32 %s8, 4
      %s90 = int_to_ptr.hbm [resolvable:$true] %s89
      %s91 = sshll.u32 [#allocation10], 4
      %s92 = int_to_ptr.vmem [resolvable:$true] %s91
      %97 = dma.hbm_to_vmem [thread:$0]  %s90, 2048, %s92, [#allocation9], 128, 128, 8
    $region37: #{tpu_custom_call.1} parent=1 // pred_fallthru
      _
    // Predicated region
    $region38: #{tpu_custom_call.1} parent=1 // pred_check
      _
    $region39: #{tpu_custom_call.1} parent=1 // pred_check_branch
      %99 = sbr.rel (0) target = $region41
    $region40: #{tpu_custom_call.1} parent=1 // pred_region
      %101 = vsyncadd [#allocation12], 0
      %s102 = sshll.u32 %s9, 4
      %s103 = int_to_ptr.hbm [resolvable:$true] %s102
      %s104 = sshll.u32 [#allocation11], 4
      %s105 = int_to_ptr.vmem [resolvable:$true] %s104
      %110 = dma.hbm_to_vmem [thread:$0]  %s103, 4096, %s105, [#allocation12], 128, 128, 8
    $region41: #{tpu_custom_call.1} parent=1 // pred_fallthru
      _
    // Predicated region
    $region42: #{tpu_custom_call.1} parent=1 // pred_check
      _
    $region43: #{tpu_custom_call.1} parent=1 // pred_check_branch
      %112 = sbr.rel (0) target = $region45
    $region44: #{tpu_custom_call.1} parent=1 // pred_region
      %114 = vsyncadd [#allocation12], 0
      %s115 = sshll.u32 %s10, 4
      %s116 = int_to_ptr.hbm [resolvable:$true] %s115
      %s117 = sshll.u32 [#allocation13], 4
      %s118 = int_to_ptr.vmem [resolvable:$true] %s117
      %123 = dma.hbm_to_vmem [thread:$0]  %s116, 4096, %s118, [#allocation12], 128, 128, 8
    $region45: #{tpu_custom_call.1} parent=1 // pred_fallthru
      _
    // Predicated region
    $region46: #{tpu_custom_call.1} parent=1 // pred_check
      _
    $region47: #{tpu_custom_call.1} parent=1 // pred_check_branch
      %125 = sbr.rel (0) target = $region49
    $region48: #{tpu_custom_call.1} parent=1 // pred_region
      %127 = vsyncadd [#allocation15], 0
      %s128 = sshll.u32 %s11, 4
      %s129 = int_to_ptr.hbm [resolvable:$true] %s128
      %s130 = sshll.u32 [#allocation14], 4
      %s131 = int_to_ptr.vmem [resolvable:$true] %s130
      %136 = dma.hbm_to_vmem [thread:$0]  %s129, 4096, %s131, [#allocation15], 128, 128, 8
    $region49: #{tpu_custom_call.1} parent=1 // pred_fallthru
      _
    // Predicated region
    $region50: #{tpu_custom_call.1} parent=1 // pred_check
      _
    $region51: #{tpu_custom_call.1} parent=1 // pred_check_branch
      %138 = sbr.rel (0) target = $region53
    $region52: #{tpu_custom_call.1} parent=1 // pred_region
      _
    $region53: #{tpu_custom_call.1} parent=1 // pred_fallthru
      _
    // Predicated region
    $region54: #{tpu_custom_call.1} parent=1 // pred_check
      _
    $region55: #{tpu_custom_call.1} parent=1 // pred_check_branch
      %140 = sbr.rel (0) target = $region57
    $region56: #{tpu_custom_call.1} parent=1 // pred_region
      _
    $region57: #{tpu_custom_call.1} parent=1 // pred_fallthru
      _
    // Predicated region
    $region58: #{tpu_custom_call.1} parent=1 // pred_check
      _
    $region59: #{tpu_custom_call.1} parent=1 // pred_check_branch
      %142 = sbr.rel (0) target = $region61
    $region60: #{tpu_custom_call.1} parent=1 // pred_region
      %144 = dma.done [#allocation3], 512
    $region61: #{tpu_custom_call.1} parent=1 // pred_fallthru
      _
    // Predicated region
    $region62: #{tpu_custom_call.1} parent=1 // pred_check
      _
    $region63: #{tpu_custom_call.1} parent=1 // pred_check_branch
      %146 = sbr.rel (0) target = $region65
    $region64: #{tpu_custom_call.1} parent=1 // pred_region
      %148 = dma.done [#allocation6], 2048
    $region65: #{tpu_custom_call.1} parent=1 // pred_fallthru
      _
    // Predicated region
    $region66: #{tpu_custom_call.1} parent=1 // pred_check
      _
    $region67: #{tpu_custom_call.1} parent=1 // pred_check_branch
      %150 = sbr.rel (0) target = $region69
    $region68: #{tpu_custom_call.1} parent=1 // pred_region
      %152 = dma.done [#allocation6], 2048
    $region69: #{tpu_custom_call.1} parent=1 // pred_fallthru
      _
    // Predicated region
    $region70: #{tpu_custom_call.1} parent=1 // pred_check
      _
    $region71: #{tpu_custom_call.1} parent=1 // pred_check_branch
      %154 = sbr.rel (0) target = $region73
    $region72: #{tpu_custom_call.1} parent=1 // pred_region
      %156 = dma.done [#allocation9], 2048
    $region73: #{tpu_custom_call.1} parent=1 // pred_fallthru
      _
    // Predicated region
    $region74: #{tpu_custom_call.1} parent=1 // pred_check
      _
    $region75: #{tpu_custom_call.1} parent=1 // pred_check_branch
      %158 = sbr.rel (0) target = $region77
    $region76: #{tpu_custom_call.1} parent=1 // pred_region
      %160 = dma.done [#allocation9], 2048
    $region77: #{tpu_custom_call.1} parent=1 // pred_fallthru
      _
    // Predicated region
    $region78: #{tpu_custom_call.1} parent=1 // pred_check
      _
    $region79: #{tpu_custom_call.1} parent=1 // pred_check_branch
      %162 = sbr.rel (0) target = $region81
    $region80: #{tpu_custom_call.1} parent=1 // pred_region
      %164 = dma.done [#allocation12], 4096
    $region81: #{tpu_custom_call.1} parent=1 // pred_fallthru
      _
    // Predicated region
    $region82: #{tpu_custom_call.1} parent=1 // pred_check
      _
    $region83: #{tpu_custom_call.1} parent=1 // pred_check_branch
      %166 = sbr.rel (0) target = $region85
    $region84: #{tpu_custom_call.1} parent=1 // pred_region
      %168 = dma.done [#allocation12], 4096
    $region85: #{tpu_custom_call.1} parent=1 // pred_fallthru
      _
    // Predicated region
    $region86: #{tpu_custom_call.1} parent=1 // pred_check
      _
    $region87: #{tpu_custom_call.1} parent=1 // pred_check_branch
      %170 = sbr.rel (0) target = $region89
    $region88: #{tpu_custom_call.1} parent=1 // pred_region
      %172 = dma.done [#allocation15], 4096
    $region89: #{tpu_custom_call.1} parent=1 // pred_fallthru
      _
    %v174 = vld [vmem:[%s0] sm:$0xff]
    %v175 = vld [vmem:[%s0 + $0x8] sm:$0xff]
    %v176 = vunpack.c.l.bf16 %v174
    %v177 = vunpack.c.h.bf16 %v174
    %v178 = vunpack.c.l.bf16 %v175
    %v179 = vunpack.c.h.bf16 %v175
    %v180 = vlaneseq
    %v181 = vshrl.u32 %v180, 7
    %v182 = vadd.s32 %v181, 8
    %vm183 = vcmp.lt.s32.totalorder %v181, 0
    %v184 = vsub.s32 0, %v181
    %v185 = vsel %vm183, %v184, %v181
    %v186 = vshrl.u32 %v185, 3
    %v187 = vand.u32 %v185, 7
    %v188 = vsub.s32 0, %v187
    %v189 = vsel %vm183, %v188, %v187
    %vm190 = vcmp.lt.s32.totalorder %v182, 0
    %v191 = vsub.s32 0, %v182
    %v192 = vsel %vm190, %v191, %v182
    %v193 = vshrl.u32 %v192, 3
    %v194 = vand.u32 %v192, 7
    %v195 = vsub.s32 0, %v194
    %v196 = vsel %vm190, %v195, %v194
    %vm197 = vcmp.ne.s32.totalorder %v189, 0
    %vm198 = vcmp.ne.s32.totalorder %v196, 0
    %vm199 = vcmp.lt.s32.totalorder %v189, 0
    %vm200 = vcmp.lt.s32.totalorder %v196, 0
    %vm201 = vmand %vm199, %vm197
    %vm202 = vmand %vm200, %vm198
    %v203 = vadd.s32 %v189, 8
    %v204 = vadd.s32 %v196, 8
    %v205 = vsel %vm201, %v203, %v189
    %v206 = vsel %vm202, %v204, %v196
    %vm207 = vcmp.ge.s32.totalorder %v205, 1
    %vm208 = vcmp.ge.s32.totalorder %v206, 1
    %v209 = vrot.slane %v176, 7
    %v210 = vrot.slane %v177, 7
    %v211 = vrot.slane %v178, 7
    %v212 = vrot.slane %v179, 7
    %vm213 = vcmp.lt.s32.totalorder %v181, 1
    %v214 = vsel %vm213, %v209, %v211
    %v215 = vsel %vm213, %v210, %v212
    %v216 = vsel %vm213, %v211, %v209
    %v217 = vsel %vm213, %v212, %v210
    %v218 = vsel %vm207, 1, 0
    %v219 = vsel %vm208, 1, 0
    %vm220 = vcmp.eq.s32.totalorder %v218, 1
    %vm221 = vcmp.eq.s32.totalorder %v219, 1
    %v222 = vsel %vm220, %v216, 0.0
    %v223 = vsel %vm220, %v217, 0.0
    %v224 = vsel %vm221, %v214, 0.0
    %v225 = vsel %vm221, %v215, 0.0
    %vm226 = vcmp.le.s32.totalorder %v205, 6
    %vm227 = vcmp.le.s32.totalorder %v206, 6
    %v228 = vrot.slane %v176, 1
    %v229 = vrot.slane %v177, 1
    %v230 = vrot.slane %v178, 1
    %v231 = vrot.slane %v179, 1
    %vm232 = vcmp.lt.s32.totalorder %v181, 7
    %v233 = vsel %vm232, %v228, %v230
    %v234 = vsel %vm232, %v229, %v231
    %v235 = vsel %vm232, %v230, %v228
    %v236 = vsel %vm232, %v231, %v229
    %v237 = vsel %vm226, 1, 0
    %v238 = vsel %vm227, 1, 0
    %vm239 = vcmp.eq.s32.totalorder %v237, 1
    %vm240 = vcmp.eq.s32.totalorder %v238, 1
    %v241 = vsel %vm239, %v233, 0.0
    %v242 = vsel %vm239, %v234, 0.0
    %v243 = vsel %vm240, %v235, 0.0
    %v244 = vsel %vm240, %v236, 0.0
    %v245 = vpack.c.bf16 %v224, %v222
    %v246 = vpack.c.bf16 %v225, %v223
    %v247 = vld [vmem:[#allocation5] sm:$0xf]
    %v248 = vld [vmem:[#allocation5 + $0x4] sm:$0xf]
    %v249 = vld [vmem:[#allocation5 + $0x8] sm:$0xf]
    %v250 = vld [vmem:[#allocation5 + $0xc] sm:$0xf]
    %v251 = vld [vmem:[#allocation5 + $0x10] sm:$0xf]
    %v252 = vld [vmem:[#allocation5 + $0x14] sm:$0xf]
    %v253 = vld [vmem:[#allocation5 + $0x18] sm:$0xf]
    %v254 = vld [vmem:[#allocation5 + $0x1c] sm:$0xf]
    %v255 = vld [vmem:[#allocation5 + $0x20] sm:$0xf]
    %v256 = vld [vmem:[#allocation5 + $0x24] sm:$0xf]
    %v257 = vld [vmem:[#allocation5 + $0x28] sm:$0xf]
    %v258 = vld [vmem:[#allocation5 + $0x2c] sm:$0xf]
    %v259 = vld [vmem:[#allocation5 + $0x30] sm:$0xf]
    %v260 = vld [vmem:[#allocation5 + $0x34] sm:$0xf]
    %v261 = vld [vmem:[#allocation5 + $0x38] sm:$0xf]
    %v262 = vld [vmem:[#allocation5 + $0x3c] sm:$0xf]
    %v263 = vld [vmem:[#allocation5 + $0x40] sm:$0xf]
    %v264 = vld [vmem:[#allocation5 + $0x44] sm:$0xf]
    %v265 = vld [vmem:[#allocation5 + $0x48] sm:$0xf]
    %v266 = vld [vmem:[#allocation5 + $0x4c] sm:$0xf]
    %v267 = vld [vmem:[#allocation5 + $0x50] sm:$0xf]
    %v268 = vld [vmem:[#allocation5 + $0x54] sm:$0xf]
    %v269 = vld [vmem:[#allocation5 + $0x58] sm:$0xf]
    %v270 = vld [vmem:[#allocation5 + $0x5c] sm:$0xf]
    %v271 = vld [vmem:[#allocation5 + $0x60] sm:$0xf]
    %v272 = vld [vmem:[#allocation5 + $0x64] sm:$0xf]
    %v273 = vld [vmem:[#allocation5 + $0x68] sm:$0xf]
    %v274 = vld [vmem:[#allocation5 + $0x6c] sm:$0xf]
    %v275 = vld [vmem:[#allocation5 + $0x70] sm:$0xf]
    %v276 = vld [vmem:[#allocation5 + $0x74] sm:$0xf]
    %v277 = vld [vmem:[#allocation5 + $0x78] sm:$0xf]
    %v278 = vld [vmem:[#allocation5 + $0x7c] sm:$0xf]
    %v279 = vld [vmem:[#allocation7] sm:$0xf]
    %v280 = vld [vmem:[#allocation7 + $0x4] sm:$0xf]
    %v281 = vld [vmem:[#allocation7 + $0x8] sm:$0xf]
    %v282 = vld [vmem:[#allocation7 + $0xc] sm:$0xf]
    %v283 = vld [vmem:[#allocation7 + $0x10] sm:$0xf]
    %v284 = vld [vmem:[#allocation7 + $0x14] sm:$0xf]
    %v285 = vld [vmem:[#allocation7 + $0x18] sm:$0xf]
    %v286 = vld [vmem:[#allocation7 + $0x1c] sm:$0xf]
    %v287 = vld [vmem:[#allocation7 + $0x20] sm:$0xf]
    %v288 = vld [vmem:[#allocation7 + $0x24] sm:$0xf]
    %v289 = vld [vmem:[#allocation7 + $0x28] sm:$0xf]
    %v290 = vld [vmem:[#allocation7 + $0x2c] sm:$0xf]
    %v291 = vld [vmem:[#allocation7 + $0x30] sm:$0xf]
    %v292 = vld [vmem:[#allocation7 + $0x34] sm:$0xf]
    %v293 = vld [vmem:[#allocation7 + $0x38] sm:$0xf]
    %v294 = vld [vmem:[#allocation7 + $0x3c] sm:$0xf]
    %v295 = vld [vmem:[#allocation7 + $0x40] sm:$0xf]
    %v296 = vld [vmem:[#allocation7 + $0x44] sm:$0xf]
    %v297 = vld [vmem:[#allocation7 + $0x48] sm:$0xf]
    %v298 = vld [vmem:[#allocation7 + $0x4c] sm:$0xf]
    %v299 = vld [vmem:[#allocation7 + $0x50] sm:$0xf]
    %v300 = vld [vmem:[#allocation7 + $0x54] sm:$0xf]
    %v301 = vld [vmem:[#allocation7 + $0x58] sm:$0xf]
    %v302 = vld [vmem:[#allocation7 + $0x5c] sm:$0xf]
    %v303 = vld [vmem:[#allocation7 + $0x60] sm:$0xf]
    %v304 = vld [vmem:[#allocation7 + $0x64] sm:$0xf]
    %v305 = vld [vmem:[#allocation7 + $0x68] sm:$0xf]
    %v306 = vld [vmem:[#allocation7 + $0x6c] sm:$0xf]
    %v307 = vld [vmem:[#allocation7 + $0x70] sm:$0xf]
    %v308 = vld [vmem:[#allocation7 + $0x74] sm:$0xf]
    %v309 = vld [vmem:[#allocation7 + $0x78] sm:$0xf]
    %v310 = vld [vmem:[#allocation7 + $0x7c] sm:$0xf]
    %v313 = vunpack.c.l.b16 %v174
    %v314 = vunpack.c.h.b16 %v174
    %v315 = vunpack.c.l.b16 %v175
    %v316 = vunpack.c.h.b16 %v175
    %v317 = vpack.c.b16 %v315, %v313
    %v318 = vpack.c.b16 %v316, %v314
    %v353 = vunpack.c.l.b16 %v279
    %v354 = vunpack.c.l.b16 %v280
    %v355 = vunpack.c.l.b16 %v281
    %v356 = vunpack.c.l.b16 %v282
    %v357 = vunpack.c.l.b16 %v283
    %v358 = vunpack.c.l.b16 %v284
    %v359 = vunpack.c.l.b16 %v285
    %v360 = vunpack.c.l.b16 %v286
    %v361 = vunpack.c.l.b16 %v287
    %v362 = vunpack.c.l.b16 %v288
    %v363 = vunpack.c.l.b16 %v289
    %v364 = vunpack.c.l.b16 %v290
    %v365 = vunpack.c.l.b16 %v291
    %v366 = vunpack.c.l.b16 %v292
    %v367 = vunpack.c.l.b16 %v293
    %v368 = vunpack.c.l.b16 %v294
    %v369 = vunpack.c.l.b16 %v295
    %v370 = vunpack.c.l.b16 %v296
    %v371 = vunpack.c.l.b16 %v297
    %v372 = vunpack.c.l.b16 %v298
    %v373 = vunpack.c.l.b16 %v299
    %v374 = vunpack.c.l.b16 %v300
    %v375 = vunpack.c.l.b16 %v301
    %v376 = vunpack.c.l.b16 %v302
    %v377 = vunpack.c.l.b16 %v303
    %v378 = vunpack.c.l.b16 %v304
    %v379 = vunpack.c.l.b16 %v305
    %v380 = vunpack.c.l.b16 %v306
    %v381 = vunpack.c.l.b16 %v307
    %v382 = vunpack.c.l.b16 %v308
    %v383 = vunpack.c.l.b16 %v309
    %v384 = vunpack.c.l.b16 %v310
    %v385 = vpack.c.b16 %v354, %v353
    %v386 = vpack.c.b16 %v356, %v355
    %v387 = vpack.c.b16 %v358, %v357
    %v388 = vpack.c.b16 %v360, %v359
    %v389 = vpack.c.b16 %v362, %v361
    %v390 = vpack.c.b16 %v364, %v363
    %v391 = vpack.c.b16 %v366, %v365
    %v392 = vpack.c.b16 %v368, %v367
    %v393 = vpack.c.b16 %v370, %v369
    %v394 = vpack.c.b16 %v372, %v371
    %v395 = vpack.c.b16 %v374, %v373
    %v396 = vpack.c.b16 %v376, %v375
    %v397 = vpack.c.b16 %v378, %v377
    %v398 = vpack.c.b16 %v380, %v379
    %v399 = vpack.c.b16 %v382, %v381
    %v400 = vpack.c.b16 %v384, %v383
    %417 = vmatpush.bf16.msra.mxu0 %v392
    %418 = vmatpush.bf16.msra.mxu0 %v391
    %419 = vmatpush.bf16.msra.mxu0 %v390
    %420 = vmatpush.bf16.msra.mxu0 %v389
    %421 = vmatpush.bf16.msra.mxu0 %v388
    %422 = vmatpush.bf16.msra.mxu0 %v387
    %423 = vmatpush.bf16.msra.mxu0 %v386
    %424 = vmatpush.bf16.msra.mxu0 %v385
    %425 = vmatmul.bf16.gmra.mxu0 %v317
    %v426 = vpop.f32.mrf.mxu0
    %v427 = vadd.f32 0.0, %v426
    %v428 = vpop.f32.mrf.mxu0
    %v429 = vadd.f32 0.0, %v428
    %430 = vdwg.mxu0
    %431 = vmatpush.bf16.msra.mxu0 %v400
    %432 = vmatpush.bf16.msra.mxu0 %v399
    %433 = vmatpush.bf16.msra.mxu0 %v398
    %434 = vmatpush.bf16.msra.mxu0 %v397
    %435 = vmatpush.bf16.msra.mxu0 %v396
    %436 = vmatpush.bf16.msra.mxu0 %v395
    %437 = vmatpush.bf16.msra.mxu0 %v394
    %438 = vmatpush.bf16.msra.mxu0 %v393
    %439 = vmatmul.bf16.gmra.mxu0 %v318
    %v440 = vpop.f32.mrf.mxu0
    %v441 = vadd.f32 %v427, %v440
    %v442 = vpop.f32.mrf.mxu0
    %v443 = vadd.f32 %v429, %v442
    %444 = vdwg.mxu0
    %v477 = vunpack.c.l.b16 %v247
    %v478 = vunpack.c.l.b16 %v248
    %v479 = vunpack.c.l.b16 %v249
    %v480 = vunpack.c.l.b16 %v250
    %v481 = vunpack.c.l.b16 %v251
    %v482 = vunpack.c.l.b16 %v252
    %v483 = vunpack.c.l.b16 %v253
    %v484 = vunpack.c.l.b16 %v254
    %v485 = vunpack.c.l.b16 %v255
    %v486 = vunpack.c.l.b16 %v256
    %v487 = vunpack.c.l.b16 %v257
    %v488 = vunpack.c.l.b16 %v258
    %v489 = vunpack.c.l.b16 %v259
    %v490 = vunpack.c.l.b16 %v260
    %v491 = vunpack.c.l.b16 %v261
    %v492 = vunpack.c.l.b16 %v262
    %v493 = vunpack.c.l.b16 %v263
    %v494 = vunpack.c.l.b16 %v264
    %v495 = vunpack.c.l.b16 %v265
    %v496 = vunpack.c.l.b16 %v266
    %v497 = vunpack.c.l.b16 %v267
    %v498 = vunpack.c.l.b16 %v268
    %v499 = vunpack.c.l.b16 %v269
    %v500 = vunpack.c.l.b16 %v270
    %v501 = vunpack.c.l.b16 %v271
    %v502 = vunpack.c.l.b16 %v272
    %v503 = vunpack.c.l.b16 %v273
    %v504 = vunpack.c.l.b16 %v274
    %v505 = vunpack.c.l.b16 %v275
    %v506 = vunpack.c.l.b16 %v276
    %v507 = vunpack.c.l.b16 %v277
    %v508 = vunpack.c.l.b16 %v278
    %v509 = vpack.c.b16 %v478, %v477
    %v510 = vpack.c.b16 %v480, %v479
    %v511 = vpack.c.b16 %v482, %v481
    %v512 = vpack.c.b16 %v484, %v483
    %v513 = vpack.c.b16 %v486, %v485
    %v514 = vpack.c.b16 %v488, %v487
    %v515 = vpack.c.b16 %v490, %v489
    %v516 = vpack.c.b16 %v492, %v491
    %v517 = vpack.c.b16 %v494, %v493
    %v518 = vpack.c.b16 %v496, %v495
    %v519 = vpack.c.b16 %v498, %v497
    %v520 = vpack.c.b16 %v500, %v499
    %v521 = vpack.c.b16 %v502, %v501
    %v522 = vpack.c.b16 %v504, %v503
    %v523 = vpack.c.b16 %v506, %v505
    %v524 = vpack.c.b16 %v508, %v507
    %541 = vmatpush.bf16.msra.mxu0 %v516
    %542 = vmatpush.bf16.msra.mxu0 %v515
    %543 = vmatpush.bf16.msra.mxu0 %v514
    %544 = vmatpush.bf16.msra.mxu0 %v513
    %545 = vmatpush.bf16.msra.mxu0 %v512
    %546 = vmatpush.bf16.msra.mxu0 %v511
    %547 = vmatpush.bf16.msra.mxu0 %v510
    %548 = vmatpush.bf16.msra.mxu0 %v509
    %549 = vmatmul.bf16.gmra.mxu0 %v245
    %v550 = vpop.f32.mrf.mxu0
    %v551 = vadd.f32 %v441, %v550
    %v552 = vpop.f32.mrf.mxu0
    %v553 = vadd.f32 %v443, %v552
    %554 = vdwg.mxu0
    %555 = vmatpush.bf16.msra.mxu0 %v524
    %556 = vmatpush.bf16.msra.mxu0 %v523
    %557 = vmatpush.bf16.msra.mxu0 %v522
    %558 = vmatpush.bf16.msra.mxu0 %v521
    %559 = vmatpush.bf16.msra.mxu0 %v520
    %560 = vmatpush.bf16.msra.mxu0 %v519
    %561 = vmatpush.bf16.msra.mxu0 %v518
    %562 = vmatpush.bf16.msra.mxu0 %v517
    %563 = vmatmul.bf16.gmra.mxu0 %v246
    %v564 = vpop.f32.mrf.mxu0
    %v565 = vadd.f32 %v551, %v564
    %v566 = vpop.f32.mrf.mxu0
    %v567 = vadd.f32 %v553, %v566
    %568 = vdwg.mxu0
    %v569 = vpack.c.bf16 %v243, %v241
    %v570 = vpack.c.bf16 %v244, %v242
    %v571 = vld [vmem:[#allocation8] sm:$0xf]
    %v572 = vld [vmem:[#allocation8 + $0x4] sm:$0xf]
    %v573 = vld [vmem:[#allocation8 + $0x8] sm:$0xf]
    %v574 = vld [vmem:[#allocation8 + $0xc] sm:$0xf]
    %v575 = vld [vmem:[#allocation8 + $0x10] sm:$0xf]
    %v576 = vld [vmem:[#allocation8 + $0x14] sm:$0xf]
    %v577 = vld [vmem:[#allocation8 + $0x18] sm:$0xf]
    %v578 = vld [vmem:[#allocation8 + $0x1c] sm:$0xf]
    %v579 = vld [vmem:[#allocation8 + $0x20] sm:$0xf]
    %v580 = vld [vmem:[#allocation8 + $0x24] sm:$0xf]
    %v581 = vld [vmem:[#allocation8 + $0x28] sm:$0xf]
    %v582 = vld [vmem:[#allocation8 + $0x2c] sm:$0xf]
    %v583 = vld [vmem:[#allocation8 + $0x30] sm:$0xf]
    %v584 = vld [vmem:[#allocation8 + $0x34] sm:$0xf]
    %v585 = vld [vmem:[#allocation8 + $0x38] sm:$0xf]
    %v586 = vld [vmem:[#allocation8 + $0x3c] sm:$0xf]
    %v587 = vld [vmem:[#allocation8 + $0x40] sm:$0xf]
    %v588 = vld [vmem:[#allocation8 + $0x44] sm:$0xf]
    %v589 = vld [vmem:[#allocation8 + $0x48] sm:$0xf]
    %v590 = vld [vmem:[#allocation8 + $0x4c] sm:$0xf]
    %v591 = vld [vmem:[#allocation8 + $0x50] sm:$0xf]
    %v592 = vld [vmem:[#allocation8 + $0x54] sm:$0xf]
    %v593 = vld [vmem:[#allocation8 + $0x58] sm:$0xf]
    %v594 = vld [vmem:[#allocation8 + $0x5c] sm:$0xf]
    %v595 = vld [vmem:[#allocation8 + $0x60] sm:$0xf]
    %v596 = vld [vmem:[#allocation8 + $0x64] sm:$0xf]
    %v597 = vld [vmem:[#allocation8 + $0x68] sm:$0xf]
    %v598 = vld [vmem:[#allocation8 + $0x6c] sm:$0xf]
    %v599 = vld [vmem:[#allocation8 + $0x70] sm:$0xf]
    %v600 = vld [vmem:[#allocation8 + $0x74] sm:$0xf]
    %v601 = vld [vmem:[#allocation8 + $0x78] sm:$0xf]
    %v602 = vld [vmem:[#allocation8 + $0x7c] sm:$0xf]
    %v635 = vunpack.c.l.b16 %v571
    %v636 = vunpack.c.l.b16 %v572
    %v637 = vunpack.c.l.b16 %v573
    %v638 = vunpack.c.l.b16 %v574
    %v639 = vunpack.c.l.b16 %v575
    %v640 = vunpack.c.l.b16 %v576
    %v641 = vunpack.c.l.b16 %v577
    %v642 = vunpack.c.l.b16 %v578
    %v643 = vunpack.c.l.b16 %v579
    %v644 = vunpack.c.l.b16 %v580
    %v645 = vunpack.c.l.b16 %v581
    %v646 = vunpack.c.l.b16 %v582
    %v647 = vunpack.c.l.b16 %v583
    %v648 = vunpack.c.l.b16 %v584
    %v649 = vunpack.c.l.b16 %v585
    %v650 = vunpack.c.l.b16 %v586
    %v651 = vunpack.c.l.b16 %v587
    %v652 = vunpack.c.l.b16 %v588
    %v653 = vunpack.c.l.b16 %v589
    %v654 = vunpack.c.l.b16 %v590
    %v655 = vunpack.c.l.b16 %v591
    %v656 = vunpack.c.l.b16 %v592
    %v657 = vunpack.c.l.b16 %v593
    %v658 = vunpack.c.l.b16 %v594
    %v659 = vunpack.c.l.b16 %v595
    %v660 = vunpack.c.l.b16 %v596
    %v661 = vunpack.c.l.b16 %v597
    %v662 = vunpack.c.l.b16 %v598
    %v663 = vunpack.c.l.b16 %v599
    %v664 = vunpack.c.l.b16 %v600
    %v665 = vunpack.c.l.b16 %v601
    %v666 = vunpack.c.l.b16 %v602
    %v667 = vpack.c.b16 %v636, %v635
    %v668 = vpack.c.b16 %v638, %v637
    %v669 = vpack.c.b16 %v640, %v639
    %v670 = vpack.c.b16 %v642, %v641
    %v671 = vpack.c.b16 %v644, %v643
    %v672 = vpack.c.b16 %v646, %v645
    %v673 = vpack.c.b16 %v648, %v647
    %v674 = vpack.c.b16 %v650, %v649
    %v675 = vpack.c.b16 %v652, %v651
    %v676 = vpack.c.b16 %v654, %v653
    %v677 = vpack.c.b16 %v656, %v655
    %v678 = vpack.c.b16 %v658, %v657
    %v679 = vpack.c.b16 %v660, %v659
    %v680 = vpack.c.b16 %v662, %v661
    %v681 = vpack.c.b16 %v664, %v663
    %v682 = vpack.c.b16 %v666, %v665
    %699 = vmatpush.bf16.msra.mxu0 %v674
    %700 = vmatpush.bf16.msra.mxu0 %v673
    %701 = vmatpush.bf16.msra.mxu0 %v672
    %702 = vmatpush.bf16.msra.mxu0 %v671
    %703 = vmatpush.bf16.msra.mxu0 %v670
    %704 = vmatpush.bf16.msra.mxu0 %v669
    %705 = vmatpush.bf16.msra.mxu0 %v668
    %706 = vmatpush.bf16.msra.mxu0 %v667
    %707 = vmatmul.bf16.gmra.mxu0 %v569
    %v708 = vpop.f32.mrf.mxu0
    %v709 = vadd.f32 0.0, %v708
    %v710 = vpop.f32.mrf.mxu0
    %v711 = vadd.f32 0.0, %v710
    %712 = vdwg.mxu0
    %713 = vmatpush.bf16.msra.mxu0 %v682
    %714 = vmatpush.bf16.msra.mxu0 %v681
    %715 = vmatpush.bf16.msra.mxu0 %v680
    %716 = vmatpush.bf16.msra.mxu0 %v679
    %717 = vmatpush.bf16.msra.mxu0 %v678
    %718 = vmatpush.bf16.msra.mxu0 %v677
    %719 = vmatpush.bf16.msra.mxu0 %v676
    %720 = vmatpush.bf16.msra.mxu0 %v675
    %721 = vmatmul.bf16.gmra.mxu0 %v570
    %v722 = vpop.f32.mrf.mxu0
    %v723 = vadd.f32 %v709, %v722
    %v724 = vpop.f32.mrf.mxu0
    %v725 = vadd.f32 %v711, %v724
    %726 = vdwg.mxu0
    %v727 = vadd.f32 %v565, %v723
    %v728 = vadd.f32 %v567, %v725
    %v729 = vld [vmem:[%s5] sm:$0x1]
    %v731 = vperm.slane %v729, 0
    %v733 = vmul.f32 %v727, %v731
    %v734 = vmul.f32 %v728, %v731
    %v735 = vld [vmem:[%s6] sm:$0x1]
    %v737 = vperm.slane %v735, 0
    %v739 = vadd.f32 %v733, %v737
    %v740 = vadd.f32 %v734, %v737
    %v741 = vmax.f32 %v739, 0.0
    %v742 = vmax.f32 %v740, 0.0
    %v743 = vld [vmem:[%s7] sm:$0xf]
    %v744 = vld [vmem:[%s7 + $0x4] sm:$0xf]
    %v745 = vld [vmem:[%s7 + $0x8] sm:$0xf]
    %v746 = vld [vmem:[%s7 + $0xc] sm:$0xf]
    %v747 = vpack.c.bf16 %v742, %v741
    %v752 = vunpack.c.l.b16 %v743
    %v753 = vunpack.c.l.b16 %v744
    %v754 = vunpack.c.l.b16 %v745
    %v755 = vunpack.c.l.b16 %v746
    %v756 = vpack.c.b16 %v753, %v752
    %v757 = vpack.c.b16 %v755, %v754
    %vm758 = vcmask 130048
    %v760 = vsel %vm758, %v756, 0
    %v763 = vsel %vm758, %v757, 0
    %765 = vmatpush.bf16.msra.mxu0 0
    %766 = vmatpush.bf16.msra.mxu0 0
    %767 = vmatpush.bf16.msra.mxu0 0
    %768 = vmatpush.bf16.msra.mxu0 0
    %769 = vmatpush.bf16.msra.mxu0 0
    %770 = vmatpush.bf16.msra.mxu0 0
    %771 = vmatpush.bf16.msra.mxu0 0
    %772 = vmatpush.bf16.msra.mxu0 %v747
    %773 = vmatmul.bf16.gmra.mxu0 %v760
    %v774 = vpop.f32.mrf.mxu0
    %v775 = vadd.f32 0.0, %v774
    %v776 = vpop.f32.mrf.mxu0
    %v777 = vadd.f32 0.0, %v776
    %778 = vmatmul.bf16.gmra.mxu0 %v763
    %v779 = vpop.f32.mrf.mxu0
    %v780 = vadd.f32 0.0, %v779
    %v781 = vpop.f32.mrf.mxu0
    %v782 = vadd.f32 0.0, %v781
    %783 = vdwg.mxu0
    %v784 = vpack.c.bf16 %v777, %v775
    %v785 = vpack.c.bf16 %v782, %v780
    %v786 = vld [vmem:[#allocation10] sm:$0xff]
    %v787 = vld [vmem:[#allocation10 + $0x8] sm:$0xff]
    %v788 = vld [vmem:[#allocation10 + $0x10] sm:$0xff]
    %v789 = vld [vmem:[#allocation10 + $0x18] sm:$0xff]
    %v790 = vld [vmem:[#allocation10 + $0x20] sm:$0xff]
    %v791 = vld [vmem:[#allocation10 + $0x28] sm:$0xff]
    %v792 = vld [vmem:[#allocation10 + $0x30] sm:$0xff]
    %v793 = vld [vmem:[#allocation10 + $0x38] sm:$0xff]
    %v794 = vld [vmem:[#allocation10 + $0x40] sm:$0xff]
    %v795 = vld [vmem:[#allocation10 + $0x48] sm:$0xff]
    %v796 = vld [vmem:[#allocation10 + $0x50] sm:$0xff]
    %v797 = vld [vmem:[#allocation10 + $0x58] sm:$0xff]
    %v798 = vld [vmem:[#allocation10 + $0x60] sm:$0xff]
    %v799 = vld [vmem:[#allocation10 + $0x68] sm:$0xff]
    %v800 = vld [vmem:[#allocation10 + $0x70] sm:$0xff]
    %v801 = vld [vmem:[#allocation10 + $0x78] sm:$0xff]
    %v802 = vld [vmem:[#allocation2] sm:$0xff]
    %v803 = vld [vmem:[#allocation2 + $0x8] sm:$0xff]
    %v804 = vld [vmem:[#allocation2 + $0x10] sm:$0xff]
    %v805 = vld [vmem:[#allocation2 + $0x18] sm:$0xff]
    %v806 = vunpack.c.l.bf16 %v802
    %v807 = vunpack.c.h.bf16 %v802
    %v808 = vunpack.c.l.bf16 %v803
    %v809 = vunpack.c.h.bf16 %v803
    %v810 = vunpack.c.l.bf16 %v804
    %v811 = vunpack.c.h.bf16 %v804
    %v812 = vunpack.c.l.bf16 %v805
    %v813 = vunpack.c.h.bf16 %v805
    %v830 = vunpack.c.l.b16 %v786
    %v831 = vunpack.c.h.b16 %v786
    %v832 = vunpack.c.l.b16 %v787
    %v833 = vunpack.c.h.b16 %v787
    %v834 = vunpack.c.l.b16 %v788
    %v835 = vunpack.c.h.b16 %v788
    %v836 = vunpack.c.l.b16 %v789
    %v837 = vunpack.c.h.b16 %v789
    %v838 = vunpack.c.l.b16 %v790
    %v839 = vunpack.c.h.b16 %v790
    %v840 = vunpack.c.l.b16 %v791
    %v841 = vunpack.c.h.b16 %v791
    %v842 = vunpack.c.l.b16 %v792
    %v843 = vunpack.c.h.b16 %v792
    %v844 = vunpack.c.l.b16 %v793
    %v845 = vunpack.c.h.b16 %v793
    %v846 = vunpack.c.l.b16 %v794
    %v847 = vunpack.c.h.b16 %v794
    %v848 = vunpack.c.l.b16 %v795
    %v849 = vunpack.c.h.b16 %v795
    %v850 = vunpack.c.l.b16 %v796
    %v851 = vunpack.c.h.b16 %v796
    %v852 = vunpack.c.l.b16 %v797
    %v853 = vunpack.c.h.b16 %v797
    %v854 = vunpack.c.l.b16 %v798
    %v855 = vunpack.c.h.b16 %v798
    %v856 = vunpack.c.l.b16 %v799
    %v857 = vunpack.c.h.b16 %v799
    %v858 = vunpack.c.l.b16 %v800
    %v859 = vunpack.c.h.b16 %v800
    %v860 = vunpack.c.l.b16 %v801
    %v861 = vunpack.c.h.b16 %v801
    %v862 = vpack.c.b16 %v832, %v830
    %v863 = vpack.c.b16 %v833, %v831
    %v864 = vpack.c.b16 %v836, %v834
    %v865 = vpack.c.b16 %v837, %v835
    %v866 = vpack.c.b16 %v840, %v838
    %v867 = vpack.c.b16 %v841, %v839
    %v868 = vpack.c.b16 %v844, %v842
    %v869 = vpack.c.b16 %v845, %v843
    %v870 = vpack.c.b16 %v848, %v846
    %v871 = vpack.c.b16 %v849, %v847
    %v872 = vpack.c.b16 %v852, %v850
    %v873 = vpack.c.b16 %v853, %v851
    %v874 = vpack.c.b16 %v856, %v854
    %v875 = vpack.c.b16 %v857, %v855
    %v876 = vpack.c.b16 %v860, %v858
    %v877 = vpack.c.b16 %v861, %v859
    %894 = vmatpush.bf16.msra.mxu0 %v876
    %895 = vmatpush.bf16.msra.mxu0 %v874
    %896 = vmatpush.bf16.msra.mxu0 %v872
    %897 = vmatpush.bf16.msra.mxu0 %v870
    %898 = vmatpush.bf16.msra.mxu0 %v868
    %899 = vmatpush.bf16.msra.mxu0 %v866
    %900 = vmatpush.bf16.msra.mxu0 %v864
    %901 = vmatpush.bf16.msra.mxu0 %v862
    %902 = vmatmul.bf16.gmra.mxu0 %v784
    %v903 = vpop.f32.mrf.mxu0
    %v904 = vadd.f32 %v806, %v903
    %v905 = vpop.f32.mrf.mxu0
    %v906 = vadd.f32 %v808, %v905
    %907 = vmatmul.bf16.gmra.mxu0 %v785
    %v908 = vpop.f32.mrf.mxu0
    %v909 = vadd.f32 %v810, %v908
    %v910 = vpop.f32.mrf.mxu0
    %v911 = vadd.f32 %v812, %v910
    %912 = vdwg.mxu0
    %913 = vmatpush.bf16.msra.mxu0 %v877
    %914 = vmatpush.bf16.msra.mxu0 %v875
    %915 = vmatpush.bf16.msra.mxu0 %v873
    %916 = vmatpush.bf16.msra.mxu0 %v871
    %917 = vmatpush.bf16.msra.mxu0 %v869
    %918 = vmatpush.bf16.msra.mxu0 %v867
    %919 = vmatpush.bf16.msra.mxu0 %v865
    %920 = vmatpush.bf16.msra.mxu0 %v863
    %921 = vmatmul.bf16.gmra.mxu0 %v784
    %v922 = vpop.f32.mrf.mxu0
    %v923 = vadd.f32 %v807, %v922
    %v924 = vpop.f32.mrf.mxu0
    %v925 = vadd.f32 %v809, %v924
    %926 = vmatmul.bf16.gmra.mxu0 %v785
    %v927 = vpop.f32.mrf.mxu0
    %v928 = vadd.f32 %v811, %v927
    %v929 = vpop.f32.mrf.mxu0
    %v930 = vadd.f32 %v813, %v929
    %931 = vdwg.mxu0
    %v932 = vadd.s32 %v181, 16
    %v933 = vadd.s32 %v181, 24
    %vm934 = vcmp.lt.s32.totalorder %v181, 0
    %v935 = vsub.s32 0, %v181
    %v936 = vsel %vm934, %v935, %v181
    %v937 = vshrl.u32 %v936, 4
    %v938 = vand.u32 %v936, 15
    %v939 = vsub.s32 0, %v938
    %v940 = vsel %vm934, %v939, %v938
    %vm941 = vcmp.lt.s32.totalorder %v182, 0
    %v942 = vsub.s32 0, %v182
    %v943 = vsel %vm941, %v942, %v182
    %v944 = vshrl.u32 %v943, 4
    %v945 = vand.u32 %v943, 15
    %v946 = vsub.s32 0, %v945
    %v947 = vsel %vm941, %v946, %v945
    %vm948 = vcmp.lt.s32.totalorder %v932, 0
    %v949 = vsub.s32 0, %v932
    %v950 = vsel %vm948, %v949, %v932
    %v951 = vshrl.u32 %v950, 4
    %v952 = vand.u32 %v950, 15
    %v953 = vsub.s32 0, %v952
    %v954 = vsel %vm948, %v953, %v952
    %vm955 = vcmp.lt.s32.totalorder %v933, 0
    %v956 = vsub.s32 0, %v933
    %v957 = vsel %vm955, %v956, %v933
    %v958 = vshrl.u32 %v957, 4
    %v959 = vand.u32 %v957, 15
    %v960 = vsub.s32 0, %v959
    %v961 = vsel %vm955, %v960, %v959
    %vm962 = vcmp.ne.s32.totalorder %v940, 0
    %vm963 = vcmp.ne.s32.totalorder %v947, 0
    %vm964 = vcmp.ne.s32.totalorder %v954, 0
    %vm965 = vcmp.ne.s32.totalorder %v961, 0
    %vm966 = vcmp.lt.s32.totalorder %v940, 0
    %vm967 = vcmp.lt.s32.totalorder %v947, 0
    %vm968 = vcmp.lt.s32.totalorder %v954, 0
    %vm969 = vcmp.lt.s32.totalorder %v961, 0
    %vm970 = vmand %vm966, %vm962
    %vm971 = vmand %vm967, %vm963
    %vm972 = vmand %vm968, %vm964
    %vm973 = vmand %vm969, %vm965
    %v974 = vadd.s32 %v940, 16
    %v975 = vadd.s32 %v947, 16
    %v976 = vadd.s32 %v954, 16
    %v977 = vadd.s32 %v961, 16
    %v978 = vsel %vm970, %v974, %v940
    %v979 = vsel %vm971, %v975, %v947
    %v980 = vsel %vm972, %v976, %v954
    %v981 = vsel %vm973, %v977, %v961
    %vm982 = vcmp.ge.s32.totalorder %v978, 1
    %vm983 = vcmp.ge.s32.totalorder %v979, 1
    %vm984 = vcmp.ge.s32.totalorder %v980, 1
    %vm985 = vcmp.ge.s32.totalorder %v981, 1
    %v986 = vrot.slane %v904, 7
    %v987 = vrot.slane %v923, 7
    %v988 = vrot.slane %v906, 7
    %v989 = vrot.slane %v925, 7
    %v990 = vrot.slane %v909, 7
    %v991 = vrot.slane %v928, 7
    %v992 = vrot.slane %v911, 7
    %v993 = vrot.slane %v930, 7
    %v994 = vsel %vm213, %v990, %v992
    %v995 = vsel %vm213, %v991, %v993
    %v996 = vsel %vm213, %v988, %v990
    %v997 = vsel %vm213, %v989, %v991
    %v998 = vsel %vm213, %v986, %v988
    %v999 = vsel %vm213, %v987, %v989
    %v1000 = vsel %vm213, %v992, %v986
    %v1001 = vsel %vm213, %v993, %v987
    %v1002 = vsel %vm982, 1, 0
    %v1003 = vsel %vm983, 1, 0
    %v1004 = vsel %vm984, 1, 0
    %v1005 = vsel %vm985, 1, 0
    %vm1006 = vcmp.eq.s32.totalorder %v1002, 1
    %vm1007 = vcmp.eq.s32.totalorder %v1003, 1
    %vm1008 = vcmp.eq.s32.totalorder %v1004, 1
    %vm1009 = vcmp.eq.s32.totalorder %v1005, 1
    %v1010 = vsel %vm1006, %v1000, 0.0
    %v1011 = vsel %vm1006, %v1001, 0.0
    %v1012 = vsel %vm1007, %v998, 0.0
    %v1013 = vsel %vm1007, %v999, 0.0
    %v1014 = vsel %vm1008, %v996, 0.0
    %v1015 = vsel %vm1008, %v997, 0.0
    %v1016 = vsel %vm1009, %v994, 0.0
    %v1017 = vsel %vm1009, %v995, 0.0
    %vm1018 = vcmp.le.s32.totalorder %v978, 14
    %vm1019 = vcmp.le.s32.totalorder %v979, 14
    %vm1020 = vcmp.le.s32.totalorder %v980, 14
    %vm1021 = vcmp.le.s32.totalorder %v981, 14
    %v1022 = vrot.slane %v904, 1
    %v1023 = vrot.slane %v923, 1
    %v1024 = vrot.slane %v906, 1
    %v1025 = vrot.slane %v925, 1
    %v1026 = vrot.slane %v909, 1
    %v1027 = vrot.slane %v928, 1
    %v1028 = vrot.slane %v911, 1
    %v1029 = vrot.slane %v930, 1
    %v1030 = vsel %vm232, %v1026, %v1028
    %v1031 = vsel %vm232, %v1027, %v1029
    %v1032 = vsel %vm232, %v1024, %v1026
    %v1033 = vsel %vm232, %v1025, %v1027
    %v1034 = vsel %vm232, %v1022, %v1024
    %v1035 = vsel %vm232, %v1023, %v1025
    %v1036 = vsel %vm232, %v1028, %v1022
    %v1037 = vsel %vm232, %v1029, %v1023
    %v1038 = vsel %vm1018, 1, 0
    %v1039 = vsel %vm1019, 1, 0
    %v1040 = vsel %vm1020, 1, 0
    %v1041 = vsel %vm1021, 1, 0
    %vm1042 = vcmp.eq.s32.totalorder %v1038, 1
    %vm1043 = vcmp.eq.s32.totalorder %v1039, 1
    %vm1044 = vcmp.eq.s32.totalorder %v1040, 1
    %vm1045 = vcmp.eq.s32.totalorder %v1041, 1
    %v1046 = vsel %vm1042, %v1034, 0.0
    %v1047 = vsel %vm1042, %v1035, 0.0
    %v1048 = vsel %vm1043, %v1032, 0.0
    %v1049 = vsel %vm1043, %v1033, 0.0
    %v1050 = vsel %vm1044, %v1030, 0.0
    %v1051 = vsel %vm1044, %v1031, 0.0
    %v1052 = vsel %vm1045, %v1036, 0.0
    %v1053 = vsel %vm1045, %v1037, 0.0
    %v1054 = vpack.c.bf16 %v1012, %v1010
    %v1055 = vpack.c.bf16 %v1013, %v1011
    %v1056 = vpack.c.bf16 %v1016, %v1014
    %v1057 = vpack.c.bf16 %v1017, %v1015
    %v1058 = vld [vmem:[#allocation11] sm:$0xff]
    %v1059 = vld [vmem:[#allocation11 + $0x8] sm:$0xff]
    %v1060 = vld [vmem:[#allocation11 + $0x10] sm:$0xff]
    %v1061 = vld [vmem:[#allocation11 + $0x18] sm:$0xff]
    %v1062 = vld [vmem:[#allocation11 + $0x20] sm:$0xff]
    %v1063 = vld [vmem:[#allocation11 + $0x28] sm:$0xff]
    %v1064 = vld [vmem:[#allocation11 + $0x30] sm:$0xff]
    %v1065 = vld [vmem:[#allocation11 + $0x38] sm:$0xff]
    %v1066 = vld [vmem:[#allocation11 + $0x40] sm:$0xff]
    %v1067 = vld [vmem:[#allocation11 + $0x48] sm:$0xff]
    %v1068 = vld [vmem:[#allocation11 + $0x50] sm:$0xff]
    %v1069 = vld [vmem:[#allocation11 + $0x58] sm:$0xff]
    %v1070 = vld [vmem:[#allocation11 + $0x60] sm:$0xff]
    %v1071 = vld [vmem:[#allocation11 + $0x68] sm:$0xff]
    %v1072 = vld [vmem:[#allocation11 + $0x70] sm:$0xff]
    %v1073 = vld [vmem:[#allocation11 + $0x78] sm:$0xff]
    %v1074 = vld [vmem:[#allocation11 + $0x80] sm:$0xff]
    %v1075 = vld [vmem:[#allocation11 + $0x88] sm:$0xff]
    %v1076 = vld [vmem:[#allocation11 + $0x90] sm:$0xff]
    %v1077 = vld [vmem:[#allocation11 + $0x98] sm:$0xff]
    %v1078 = vld [vmem:[#allocation11 + $0xa0] sm:$0xff]
    %v1079 = vld [vmem:[#allocation11 + $0xa8] sm:$0xff]
    %v1080 = vld [vmem:[#allocation11 + $0xb0] sm:$0xff]
    %v1081 = vld [vmem:[#allocation11 + $0xb8] sm:$0xff]
    %v1082 = vld [vmem:[#allocation11 + $0xc0] sm:$0xff]
    %v1083 = vld [vmem:[#allocation11 + $0xc8] sm:$0xff]
    %v1084 = vld [vmem:[#allocation11 + $0xd0] sm:$0xff]
    %v1085 = vld [vmem:[#allocation11 + $0xd8] sm:$0xff]
    %v1086 = vld [vmem:[#allocation11 + $0xe0] sm:$0xff]
    %v1087 = vld [vmem:[#allocation11 + $0xe8] sm:$0xff]
    %v1088 = vld [vmem:[#allocation11 + $0xf0] sm:$0xff]
    %v1089 = vld [vmem:[#allocation11 + $0xf8] sm:$0xff]
    %v1090 = vpack.c.bf16 %v906, %v904
    %v1091 = vpack.c.bf16 %v925, %v923
    %v1092 = vpack.c.bf16 %v911, %v909
    %v1093 = vpack.c.bf16 %v930, %v928
    %v1094 = vld [vmem:[#allocation13] sm:$0xff]
    %v1095 = vld [vmem:[#allocation13 + $0x8] sm:$0xff]
    %v1096 = vld [vmem:[#allocation13 + $0x10] sm:$0xff]
    %v1097 = vld [vmem:[#allocation13 + $0x18] sm:$0xff]
    %v1098 = vld [vmem:[#allocation13 + $0x20] sm:$0xff]
    %v1099 = vld [vmem:[#allocation13 + $0x28] sm:$0xff]
    %v1100 = vld [vmem:[#allocation13 + $0x30] sm:$0xff]
    %v1101 = vld [vmem:[#allocation13 + $0x38] sm:$0xff]
    %v1102 = vld [vmem:[#allocation13 + $0x40] sm:$0xff]
    %v1103 = vld [vmem:[#allocation13 + $0x48] sm:$0xff]
    %v1104 = vld [vmem:[#allocation13 + $0x50] sm:$0xff]
    %v1105 = vld [vmem:[#allocation13 + $0x58] sm:$0xff]
    %v1106 = vld [vmem:[#allocation13 + $0x60] sm:$0xff]
    %v1107 = vld [vmem:[#allocation13 + $0x68] sm:$0xff]
    %v1108 = vld [vmem:[#allocation13 + $0x70] sm:$0xff]
    %v1109 = vld [vmem:[#allocation13 + $0x78] sm:$0xff]
    %v1110 = vld [vmem:[#allocation13 + $0x80] sm:$0xff]
    %v1111 = vld [vmem:[#allocation13 + $0x88] sm:$0xff]
    %v1112 = vld [vmem:[#allocation13 + $0x90] sm:$0xff]
    %v1113 = vld [vmem:[#allocation13 + $0x98] sm:$0xff]
    %v1114 = vld [vmem:[#allocation13 + $0xa0] sm:$0xff]
    %v1115 = vld [vmem:[#allocation13 + $0xa8] sm:$0xff]
    %v1116 = vld [vmem:[#allocation13 + $0xb0] sm:$0xff]
    %v1117 = vld [vmem:[#allocation13 + $0xb8] sm:$0xff]
    %v1118 = vld [vmem:[#allocation13 + $0xc0] sm:$0xff]
    %v1119 = vld [vmem:[#allocation13 + $0xc8] sm:$0xff]
    %v1120 = vld [vmem:[#allocation13 + $0xd0] sm:$0xff]
    %v1121 = vld [vmem:[#allocation13 + $0xd8] sm:$0xff]
    %v1122 = vld [vmem:[#allocation13 + $0xe0] sm:$0xff]
    %v1123 = vld [vmem:[#allocation13 + $0xe8] sm:$0xff]
    %v1124 = vld [vmem:[#allocation13 + $0xf0] sm:$0xff]
    %v1125 = vld [vmem:[#allocation13 + $0xf8] sm:$0xff]
    %v1158 = vunpack.c.l.b16 %v1094
    %v1159 = vunpack.c.h.b16 %v1094
    %v1160 = vunpack.c.l.b16 %v1095
    %v1161 = vunpack.c.h.b16 %v1095
    %v1162 = vunpack.c.l.b16 %v1096
    %v1163 = vunpack.c.h.b16 %v1096
    %v1164 = vunpack.c.l.b16 %v1097
    %v1165 = vunpack.c.h.b16 %v1097
    %v1166 = vunpack.c.l.b16 %v1098
    %v1167 = vunpack.c.h.b16 %v1098
    %v1168 = vunpack.c.l.b16 %v1099
    %v1169 = vunpack.c.h.b16 %v1099
    %v1170 = vunpack.c.l.b16 %v1100
    %v1171 = vunpack.c.h.b16 %v1100
    %v1172 = vunpack.c.l.b16 %v1101
    %v1173 = vunpack.c.h.b16 %v1101
    %v1174 = vunpack.c.l.b16 %v1102
    %v1175 = vunpack.c.h.b16 %v1102
    %v1176 = vunpack.c.l.b16 %v1103
    %v1177 = vunpack.c.h.b16 %v1103
    %v1178 = vunpack.c.l.b16 %v1104
    %v1179 = vunpack.c.h.b16 %v1104
    %v1180 = vunpack.c.l.b16 %v1105
    %v1181 = vunpack.c.h.b16 %v1105
    %v1182 = vunpack.c.l.b16 %v1106
    %v1183 = vunpack.c.h.b16 %v1106
    %v1184 = vunpack.c.l.b16 %v1107
    %v1185 = vunpack.c.h.b16 %v1107
    %v1186 = vunpack.c.l.b16 %v1108
    %v1187 = vunpack.c.h.b16 %v1108
    %v1188 = vunpack.c.l.b16 %v1109
    %v1189 = vunpack.c.h.b16 %v1109
    %v1190 = vunpack.c.l.b16 %v1110
    %v1191 = vunpack.c.h.b16 %v1110
    %v1192 = vunpack.c.l.b16 %v1111
    %v1193 = vunpack.c.h.b16 %v1111
    %v1194 = vunpack.c.l.b16 %v1112
    %v1195 = vunpack.c.h.b16 %v1112
    %v1196 = vunpack.c.l.b16 %v1113
    %v1197 = vunpack.c.h.b16 %v1113
    %v1198 = vunpack.c.l.b16 %v1114
    %v1199 = vunpack.c.h.b16 %v1114
    %v1200 = vunpack.c.l.b16 %v1115
    %v1201 = vunpack.c.h.b16 %v1115
    %v1202 = vunpack.c.l.b16 %v1116
    %v1203 = vunpack.c.h.b16 %v1116
    %v1204 = vunpack.c.l.b16 %v1117
    %v1205 = vunpack.c.h.b16 %v1117
    %v1206 = vunpack.c.l.b16 %v1118
    %v1207 = vunpack.c.h.b16 %v1118
    %v1208 = vunpack.c.l.b16 %v1119
    %v1209 = vunpack.c.h.b16 %v1119
    %v1210 = vunpack.c.l.b16 %v1120
    %v1211 = vunpack.c.h.b16 %v1120
    %v1212 = vunpack.c.l.b16 %v1121
    %v1213 = vunpack.c.h.b16 %v1121
    %v1214 = vunpack.c.l.b16 %v1122
    %v1215 = vunpack.c.h.b16 %v1122
    %v1216 = vunpack.c.l.b16 %v1123
    %v1217 = vunpack.c.h.b16 %v1123
    %v1218 = vunpack.c.l.b16 %v1124
    %v1219 = vunpack.c.h.b16 %v1124
    %v1220 = vunpack.c.l.b16 %v1125
    %v1221 = vunpack.c.h.b16 %v1125
    %v1222 = vpack.c.b16 %v1160, %v1158
    %v1223 = vpack.c.b16 %v1161, %v1159
    %v1224 = vpack.c.b16 %v1164, %v1162
    %v1225 = vpack.c.b16 %v1165, %v1163
    %v1226 = vpack.c.b16 %v1168, %v1166
    %v1227 = vpack.c.b16 %v1169, %v1167
    %v1228 = vpack.c.b16 %v1172, %v1170
    %v1229 = vpack.c.b16 %v1173, %v1171
    %v1230 = vpack.c.b16 %v1176, %v1174
    %v1231 = vpack.c.b16 %v1177, %v1175
    %v1232 = vpack.c.b16 %v1180, %v1178
    %v1233 = vpack.c.b16 %v1181, %v1179
    %v1234 = vpack.c.b16 %v1184, %v1182
    %v1235 = vpack.c.b16 %v1185, %v1183
    %v1236 = vpack.c.b16 %v1188, %v1186
    %v1237 = vpack.c.b16 %v1189, %v1187
    %v1238 = vpack.c.b16 %v1192, %v1190
    %v1239 = vpack.c.b16 %v1193, %v1191
    %v1240 = vpack.c.b16 %v1196, %v1194
    %v1241 = vpack.c.b16 %v1197, %v1195
    %v1242 = vpack.c.b16 %v1200, %v1198
    %v1243 = vpack.c.b16 %v1201, %v1199
    %v1244 = vpack.c.b16 %v1204, %v1202
    %v1245 = vpack.c.b16 %v1205, %v1203
    %v1246 = vpack.c.b16 %v1208, %v1206
    %v1247 = vpack.c.b16 %v1209, %v1207
    %v1248 = vpack.c.b16 %v1212, %v1210
    %v1249 = vpack.c.b16 %v1213, %v1211
    %v1250 = vpack.c.b16 %v1216, %v1214
    %v1251 = vpack.c.b16 %v1217, %v1215
    %v1252 = vpack.c.b16 %v1220, %v1218
    %v1253 = vpack.c.b16 %v1221, %v1219
    %1286 = vmatpush.bf16.msra.mxu0 %v1236
    %1287 = vmatpush.bf16.msra.mxu0 %v1234
    %1288 = vmatpush.bf16.msra.mxu0 %v1232
    %1289 = vmatpush.bf16.msra.mxu0 %v1230
    %1290 = vmatpush.bf16.msra.mxu0 %v1228
    %1291 = vmatpush.bf16.msra.mxu0 %v1226
    %1292 = vmatpush.bf16.msra.mxu0 %v1224
    %1293 = vmatpush.bf16.msra.mxu0 %v1222
    %1294 = vmatmul.bf16.gmra.mxu0 %v1090
    %v1295 = vpop.f32.mrf.mxu0
    %v1296 = vadd.f32 0.0, %v1295
    %v1297 = vpop.f32.mrf.mxu0
    %v1298 = vadd.f32 0.0, %v1297
    %1299 = vmatmul.bf16.gmra.mxu0 %v1092
    %v1300 = vpop.f32.mrf.mxu0
    %v1301 = vadd.f32 0.0, %v1300
    %v1302 = vpop.f32.mrf.mxu0
    %v1303 = vadd.f32 0.0, %v1302
    %1304 = vdwg.mxu0
    %1305 = vmatpush.bf16.msra.mxu0 %v1252
    %1306 = vmatpush.bf16.msra.mxu0 %v1250
    %1307 = vmatpush.bf16.msra.mxu0 %v1248
    %1308 = vmatpush.bf16.msra.mxu0 %v1246
    %1309 = vmatpush.bf16.msra.mxu0 %v1244
    %1310 = vmatpush.bf16.msra.mxu0 %v1242
    %1311 = vmatpush.bf16.msra.mxu0 %v1240
    %1312 = vmatpush.bf16.msra.mxu0 %v1238
    %1313 = vmatmul.bf16.gmra.mxu0 %v1091
    %v1314 = vpop.f32.mrf.mxu0
    %v1315 = vadd.f32 %v1296, %v1314
    %v1316 = vpop.f32.mrf.mxu0
    %v1317 = vadd.f32 %v1298, %v1316
    %1318 = vmatmul.bf16.gmra.mxu0 %v1093
    %v1319 = vpop.f32.mrf.mxu0
    %v1320 = vadd.f32 %v1301, %v1319
    %v1321 = vpop.f32.mrf.mxu0
    %v1322 = vadd.f32 %v1303, %v1321
    %1323 = vdwg.mxu0
    %1324 = vmatpush.bf16.msra.mxu0 %v1237
    %1325 = vmatpush.bf16.msra.mxu0 %v1235
    %1326 = vmatpush.bf16.msra.mxu0 %v1233
    %1327 = vmatpush.bf16.msra.mxu0 %v1231
    %1328 = vmatpush.bf16.msra.mxu0 %v1229
    %1329 = vmatpush.bf16.msra.mxu0 %v1227
    %1330 = vmatpush.bf16.msra.mxu0 %v1225
    %1331 = vmatpush.bf16.msra.mxu0 %v1223
    %1332 = vmatmul.bf16.gmra.mxu0 %v1090
    %v1333 = vpop.f32.mrf.mxu0
    %v1334 = vadd.f32 0.0, %v1333
    %v1335 = vpop.f32.mrf.mxu0
    %v1336 = vadd.f32 0.0, %v1335
    %1337 = vmatmul.bf16.gmra.mxu0 %v1092
    %v1338 = vpop.f32.mrf.mxu0
    %v1339 = vadd.f32 0.0, %v1338
    %v1340 = vpop.f32.mrf.mxu0
    %v1341 = vadd.f32 0.0, %v1340
    %1342 = vdwg.mxu0
    %1343 = vmatpush.bf16.msra.mxu0 %v1253
    %1344 = vmatpush.bf16.msra.mxu0 %v1251
    %1345 = vmatpush.bf16.msra.mxu0 %v1249
    %1346 = vmatpush.bf16.msra.mxu0 %v1247
    %1347 = vmatpush.bf16.msra.mxu0 %v1245
    %1348 = vmatpush.bf16.msra.mxu0 %v1243
    %1349 = vmatpush.bf16.msra.mxu0 %v1241
    %1350 = vmatpush.bf16.msra.mxu0 %v1239
    %1351 = vmatmul.bf16.gmra.mxu0 %v1091
    %v1352 = vpop.f32.mrf.mxu0
    %v1353 = vadd.f32 %v1334, %v1352
    %v1354 = vpop.f32.mrf.mxu0
    %v1355 = vadd.f32 %v1336, %v1354
    %1356 = vmatmul.bf16.gmra.mxu0 %v1093
    %v1357 = vpop.f32.mrf.mxu0
    %v1358 = vadd.f32 %v1339, %v1357
    %v1359 = vpop.f32.mrf.mxu0
    %v1360 = vadd.f32 %v1341, %v1359
    %1361 = vdwg.mxu0
    %v1394 = vunpack.c.l.b16 %v1058
    %v1395 = vunpack.c.h.b16 %v1058
    %v1396 = vunpack.c.l.b16 %v1059
    %v1397 = vunpack.c.h.b16 %v1059
    %v1398 = vunpack.c.l.b16 %v1060
    %v1399 = vunpack.c.h.b16 %v1060
    %v1400 = vunpack.c.l.b16 %v1061
    %v1401 = vunpack.c.h.b16 %v1061
    %v1402 = vunpack.c.l.b16 %v1062
    %v1403 = vunpack.c.h.b16 %v1062
    %v1404 = vunpack.c.l.b16 %v1063
    %v1405 = vunpack.c.h.b16 %v1063
    %v1406 = vunpack.c.l.b16 %v1064
    %v1407 = vunpack.c.h.b16 %v1064
    %v1408 = vunpack.c.l.b16 %v1065
    %v1409 = vunpack.c.h.b16 %v1065
    %v1410 = vunpack.c.l.b16 %v1066
    %v1411 = vunpack.c.h.b16 %v1066
    %v1412 = vunpack.c.l.b16 %v1067
    %v1413 = vunpack.c.h.b16 %v1067
    %v1414 = vunpack.c.l.b16 %v1068
    %v1415 = vunpack.c.h.b16 %v1068
    %v1416 = vunpack.c.l.b16 %v1069
    %v1417 = vunpack.c.h.b16 %v1069
    %v1418 = vunpack.c.l.b16 %v1070
    %v1419 = vunpack.c.h.b16 %v1070
    %v1420 = vunpack.c.l.b16 %v1071
    %v1421 = vunpack.c.h.b16 %v1071
    %v1422 = vunpack.c.l.b16 %v1072
    %v1423 = vunpack.c.h.b16 %v1072
    %v1424 = vunpack.c.l.b16 %v1073
    %v1425 = vunpack.c.h.b16 %v1073
    %v1426 = vunpack.c.l.b16 %v1074
    %v1427 = vunpack.c.h.b16 %v1074
    %v1428 = vunpack.c.l.b16 %v1075
    %v1429 = vunpack.c.h.b16 %v1075
    %v1430 = vunpack.c.l.b16 %v1076
    %v1431 = vunpack.c.h.b16 %v1076
    %v1432 = vunpack.c.l.b16 %v1077
    %v1433 = vunpack.c.h.b16 %v1077
    %v1434 = vunpack.c.l.b16 %v1078
    %v1435 = vunpack.c.h.b16 %v1078
    %v1436 = vunpack.c.l.b16 %v1079
    %v1437 = vunpack.c.h.b16 %v1079
    %v1438 = vunpack.c.l.b16 %v1080
    %v1439 = vunpack.c.h.b16 %v1080
    %v1440 = vunpack.c.l.b16 %v1081
    %v1441 = vunpack.c.h.b16 %v1081
    %v1442 = vunpack.c.l.b16 %v1082
    %v1443 = vunpack.c.h.b16 %v1082
    %v1444 = vunpack.c.l.b16 %v1083
    %v1445 = vunpack.c.h.b16 %v1083
    %v1446 = vunpack.c.l.b16 %v1084
    %v1447 = vunpack.c.h.b16 %v1084
    %v1448 = vunpack.c.l.b16 %v1085
    %v1449 = vunpack.c.h.b16 %v1085
    %v1450 = vunpack.c.l.b16 %v1086
    %v1451 = vunpack.c.h.b16 %v1086
    %v1452 = vunpack.c.l.b16 %v1087
    %v1453 = vunpack.c.h.b16 %v1087
    %v1454 = vunpack.c.l.b16 %v1088
    %v1455 = vunpack.c.h.b16 %v1088
    %v1456 = vunpack.c.l.b16 %v1089
    %v1457 = vunpack.c.h.b16 %v1089
    %v1458 = vpack.c.b16 %v1396, %v1394
    %v1459 = vpack.c.b16 %v1397, %v1395
    %v1460 = vpack.c.b16 %v1400, %v1398
    %v1461 = vpack.c.b16 %v1401, %v1399
    %v1462 = vpack.c.b16 %v1404, %v1402
    %v1463 = vpack.c.b16 %v1405, %v1403
    %v1464 = vpack.c.b16 %v1408, %v1406
    %v1465 = vpack.c.b16 %v1409, %v1407
    %v1466 = vpack.c.b16 %v1412, %v1410
    %v1467 = vpack.c.b16 %v1413, %v1411
    %v1468 = vpack.c.b16 %v1416, %v1414
    %v1469 = vpack.c.b16 %v1417, %v1415
    %v1470 = vpack.c.b16 %v1420, %v1418
    %v1471 = vpack.c.b16 %v1421, %v1419
    %v1472 = vpack.c.b16 %v1424, %v1422
    %v1473 = vpack.c.b16 %v1425, %v1423
    %v1474 = vpack.c.b16 %v1428, %v1426
    %v1475 = vpack.c.b16 %v1429, %v1427
    %v1476 = vpack.c.b16 %v1432, %v1430
    %v1477 = vpack.c.b16 %v1433, %v1431
    %v1478 = vpack.c.b16 %v1436, %v1434
    %v1479 = vpack.c.b16 %v1437, %v1435
    %v1480 = vpack.c.b16 %v1440, %v1438
    %v1481 = vpack.c.b16 %v1441, %v1439
    %v1482 = vpack.c.b16 %v1444, %v1442
    %v1483 = vpack.c.b16 %v1445, %v1443
    %v1484 = vpack.c.b16 %v1448, %v1446
    %v1485 = vpack.c.b16 %v1449, %v1447
    %v1486 = vpack.c.b16 %v1452, %v1450
    %v1487 = vpack.c.b16 %v1453, %v1451
    %v1488 = vpack.c.b16 %v1456, %v1454
    %v1489 = vpack.c.b16 %v1457, %v1455
    %1522 = vmatpush.bf16.msra.mxu0 %v1472
    %1523 = vmatpush.bf16.msra.mxu0 %v1470
    %1524 = vmatpush.bf16.msra.mxu0 %v1468
    %1525 = vmatpush.bf16.msra.mxu0 %v1466
    %1526 = vmatpush.bf16.msra.mxu0 %v1464
    %1527 = vmatpush.bf16.msra.mxu0 %v1462
    %1528 = vmatpush.bf16.msra.mxu0 %v1460
    %1529 = vmatpush.bf16.msra.mxu0 %v1458
    %1530 = vmatmul.bf16.gmra.mxu0 %v1054
    %v1531 = vpop.f32.mrf.mxu0
    %v1532 = vadd.f32 %v1315, %v1531
    %v1533 = vpop.f32.mrf.mxu0
    %v1534 = vadd.f32 %v1317, %v1533
    %1535 = vmatmul.bf16.gmra.mxu0 %v1056
    %v1536 = vpop.f32.mrf.mxu0
    %v1537 = vadd.f32 %v1320, %v1536
    %v1538 = vpop.f32.mrf.mxu0
    %v1539 = vadd.f32 %v1322, %v1538
    %1540 = vdwg.mxu0
    %1541 = vmatpush.bf16.msra.mxu0 %v1488
    %1542 = vmatpush.bf16.msra.mxu0 %v1486
    %1543 = vmatpush.bf16.msra.mxu0 %v1484
    %1544 = vmatpush.bf16.msra.mxu0 %v1482
    %1545 = vmatpush.bf16.msra.mxu0 %v1480
    %1546 = vmatpush.bf16.msra.mxu0 %v1478
    %1547 = vmatpush.bf16.msra.mxu0 %v1476
    %1548 = vmatpush.bf16.msra.mxu0 %v1474
    %1549 = vmatmul.bf16.gmra.mxu0 %v1055
    %v1550 = vpop.f32.mrf.mxu0
    %v1551 = vadd.f32 %v1532, %v1550
    %v1552 = vpop.f32.mrf.mxu0
    %v1553 = vadd.f32 %v1534, %v1552
    %1554 = vmatmul.bf16.gmra.mxu0 %v1057
    %v1555 = vpop.f32.mrf.mxu0
    %v1556 = vadd.f32 %v1537, %v1555
    %v1557 = vpop.f32.mrf.mxu0
    %v1558 = vadd.f32 %v1539, %v1557
    %1559 = vdwg.mxu0
    %1560 = vmatpush.bf16.msra.mxu0 %v1473
    %1561 = vmatpush.bf16.msra.mxu0 %v1471
    %1562 = vmatpush.bf16.msra.mxu0 %v1469
    %1563 = vmatpush.bf16.msra.mxu0 %v1467
    %1564 = vmatpush.bf16.msra.mxu0 %v1465
    %1565 = vmatpush.bf16.msra.mxu0 %v1463
    %1566 = vmatpush.bf16.msra.mxu0 %v1461
    %1567 = vmatpush.bf16.msra.mxu0 %v1459
    %1568 = vmatmul.bf16.gmra.mxu0 %v1054
    %v1569 = vpop.f32.mrf.mxu0
    %v1570 = vadd.f32 %v1353, %v1569
    %v1571 = vpop.f32.mrf.mxu0
    %v1572 = vadd.f32 %v1355, %v1571
    %1573 = vmatmul.bf16.gmra.mxu0 %v1056
    %v1574 = vpop.f32.mrf.mxu0
    %v1575 = vadd.f32 %v1358, %v1574
    %v1576 = vpop.f32.mrf.mxu0
    %v1577 = vadd.f32 %v1360, %v1576
    %1578 = vdwg.mxu0
    %1579 = vmatpush.bf16.msra.mxu0 %v1489
    %1580 = vmatpush.bf16.msra.mxu0 %v1487
    %1581 = vmatpush.bf16.msra.mxu0 %v1485
    %1582 = vmatpush.bf16.msra.mxu0 %v1483
    %1583 = vmatpush.bf16.msra.mxu0 %v1481
    %1584 = vmatpush.bf16.msra.mxu0 %v1479
    %1585 = vmatpush.bf16.msra.mxu0 %v1477
    %1586 = vmatpush.bf16.msra.mxu0 %v1475
    %1587 = vmatmul.bf16.gmra.mxu0 %v1055
    %v1588 = vpop.f32.mrf.mxu0
    %v1589 = vadd.f32 %v1570, %v1588
    %v1590 = vpop.f32.mrf.mxu0
    %v1591 = vadd.f32 %v1572, %v1590
    %1592 = vmatmul.bf16.gmra.mxu0 %v1057
    %v1593 = vpop.f32.mrf.mxu0
    %v1594 = vadd.f32 %v1575, %v1593
    %v1595 = vpop.f32.mrf.mxu0
    %v1596 = vadd.f32 %v1577, %v1595
    %1597 = vdwg.mxu0
    %v1598 = vpack.c.bf16 %v1048, %v1046
    %v1599 = vpack.c.bf16 %v1049, %v1047
    %v1600 = vpack.c.bf16 %v1052, %v1050
    %v1601 = vpack.c.bf16 %v1053, %v1051
    %v1602 = vld [vmem:[#allocation14] sm:$0xff]
    %v1603 = vld [vmem:[#allocation14 + $0x8] sm:$0xff]
    %v1604 = vld [vmem:[#allocation14 + $0x10] sm:$0xff]
    %v1605 = vld [vmem:[#allocation14 + $0x18] sm:$0xff]
    %v1606 = vld [vmem:[#allocation14 + $0x20] sm:$0xff]
    %v1607 = vld [vmem:[#allocation14 + $0x28] sm:$0xff]
    %v1608 = vld [vmem:[#allocation14 + $0x30] sm:$0xff]
    %v1609 = vld [vmem:[#allocation14 + $0x38] sm:$0xff]
    %v1610 = vld [vmem:[#allocation14 + $0x40] sm:$0xff]
    %v1611 = vld [vmem:[#allocation14 + $0x48] sm:$0xff]
    %v1612 = vld [vmem:[#allocation14 + $0x50] sm:$0xff]
    %v1613 = vld [vmem:[#allocation14 + $0x58] sm:$0xff]
    %v1614 = vld [vmem:[#allocation14 + $0x60] sm:$0xff]
    %v1615 = vld [vmem:[#allocation14 + $0x68] sm:$0xff]
    %v1616 = vld [vmem:[#allocation14 + $0x70] sm:$0xff]
    %v1617 = vld [vmem:[#allocation14 + $0x78] sm:$0xff]
    %v1618 = vld [vmem:[#allocation14 + $0x80] sm:$0xff]
    %v1619 = vld [vmem:[#allocation14 + $0x88] sm:$0xff]
    %v1620 = vld [vmem:[#allocation14 + $0x90] sm:$0xff]
    %v1621 = vld [vmem:[#allocation14 + $0x98] sm:$0xff]
    %v1622 = vld [vmem:[#allocation14 + $0xa0] sm:$0xff]
    %v1623 = vld [vmem:[#allocation14 + $0xa8] sm:$0xff]
    %v1624 = vld [vmem:[#allocation14 + $0xb0] sm:$0xff]
    %v1625 = vld [vmem:[#allocation14 + $0xb8] sm:$0xff]
    %v1626 = vld [vmem:[#allocation14 + $0xc0] sm:$0xff]
    %v1627 = vld [vmem:[#allocation14 + $0xc8] sm:$0xff]
    %v1628 = vld [vmem:[#allocation14 + $0xd0] sm:$0xff]
    %v1629 = vld [vmem:[#allocation14 + $0xd8] sm:$0xff]
    %v1630 = vld [vmem:[#allocation14 + $0xe0] sm:$0xff]
    %v1631 = vld [vmem:[#allocation14 + $0xe8] sm:$0xff]
    %v1632 = vld [vmem:[#allocation14 + $0xf0] sm:$0xff]
    %v1633 = vld [vmem:[#allocation14 + $0xf8] sm:$0xff]
    %v1666 = vunpack.c.l.b16 %v1602
    %v1667 = vunpack.c.h.b16 %v1602
    %v1668 = vunpack.c.l.b16 %v1603
    %v1669 = vunpack.c.h.b16 %v1603
    %v1670 = vunpack.c.l.b16 %v1604
    %v1671 = vunpack.c.h.b16 %v1604
    %v1672 = vunpack.c.l.b16 %v1605
    %v1673 = vunpack.c.h.b16 %v1605
    %v1674 = vunpack.c.l.b16 %v1606
    %v1675 = vunpack.c.h.b16 %v1606
    %v1676 = vunpack.c.l.b16 %v1607
    %v1677 = vunpack.c.h.b16 %v1607
    %v1678 = vunpack.c.l.b16 %v1608
    %v1679 = vunpack.c.h.b16 %v1608
    %v1680 = vunpack.c.l.b16 %v1609
    %v1681 = vunpack.c.h.b16 %v1609
    %v1682 = vunpack.c.l.b16 %v1610
    %v1683 = vunpack.c.h.b16 %v1610
    %v1684 = vunpack.c.l.b16 %v1611
    %v1685 = vunpack.c.h.b16 %v1611
    %v1686 = vunpack.c.l.b16 %v1612
    %v1687 = vunpack.c.h.b16 %v1612
    %v1688 = vunpack.c.l.b16 %v1613
    %v1689 = vunpack.c.h.b16 %v1613
    %v1690 = vunpack.c.l.b16 %v1614
    %v1691 = vunpack.c.h.b16 %v1614
    %v1692 = vunpack.c.l.b16 %v1615
    %v1693 = vunpack.c.h.b16 %v1615
    %v1694 = vunpack.c.l.b16 %v1616
    %v1695 = vunpack.c.h.b16 %v1616
    %v1696 = vunpack.c.l.b16 %v1617
    %v1697 = vunpack.c.h.b16 %v1617
    %v1698 = vunpack.c.l.b16 %v1618
    %v1699 = vunpack.c.h.b16 %v1618
    %v1700 = vunpack.c.l.b16 %v1619
    %v1701 = vunpack.c.h.b16 %v1619
    %v1702 = vunpack.c.l.b16 %v1620
    %v1703 = vunpack.c.h.b16 %v1620
    %v1704 = vunpack.c.l.b16 %v1621
    %v1705 = vunpack.c.h.b16 %v1621
    %v1706 = vunpack.c.l.b16 %v1622
    %v1707 = vunpack.c.h.b16 %v1622
    %v1708 = vunpack.c.l.b16 %v1623
    %v1709 = vunpack.c.h.b16 %v1623
    %v1710 = vunpack.c.l.b16 %v1624
    %v1711 = vunpack.c.h.b16 %v1624
    %v1712 = vunpack.c.l.b16 %v1625
    %v1713 = vunpack.c.h.b16 %v1625
    %v1714 = vunpack.c.l.b16 %v1626
    %v1715 = vunpack.c.h.b16 %v1626
    %v1716 = vunpack.c.l.b16 %v1627
    %v1717 = vunpack.c.h.b16 %v1627
    %v1718 = vunpack.c.l.b16 %v1628
    %v1719 = vunpack.c.h.b16 %v1628
    %v1720 = vunpack.c.l.b16 %v1629
    %v1721 = vunpack.c.h.b16 %v1629
    %v1722 = vunpack.c.l.b16 %v1630
    %v1723 = vunpack.c.h.b16 %v1630
    %v1724 = vunpack.c.l.b16 %v1631
    %v1725 = vunpack.c.h.b16 %v1631
    %v1726 = vunpack.c.l.b16 %v1632
    %v1727 = vunpack.c.h.b16 %v1632
    %v1728 = vunpack.c.l.b16 %v1633
    %v1729 = vunpack.c.h.b16 %v1633
    %v1730 = vpack.c.b16 %v1668, %v1666
    %v1731 = vpack.c.b16 %v1669, %v1667
    %v1732 = vpack.c.b16 %v1672, %v1670
    %v1733 = vpack.c.b16 %v1673, %v1671
    %v1734 = vpack.c.b16 %v1676, %v1674
    %v1735 = vpack.c.b16 %v1677, %v1675
    %v1736 = vpack.c.b16 %v1680, %v1678
    %v1737 = vpack.c.b16 %v1681, %v1679
    %v1738 = vpack.c.b16 %v1684, %v1682
    %v1739 = vpack.c.b16 %v1685, %v1683
    %v1740 = vpack.c.b16 %v1688, %v1686
    %v1741 = vpack.c.b16 %v1689, %v1687
    %v1742 = vpack.c.b16 %v1692, %v1690
    %v1743 = vpack.c.b16 %v1693, %v1691
    %v1744 = vpack.c.b16 %v1696, %v1694
    %v1745 = vpack.c.b16 %v1697, %v1695
    %v1746 = vpack.c.b16 %v1700, %v1698
    %v1747 = vpack.c.b16 %v1701, %v1699
    %v1748 = vpack.c.b16 %v1704, %v1702
    %v1749 = vpack.c.b16 %v1705, %v1703
    %v1750 = vpack.c.b16 %v1708, %v1706
    %v1751 = vpack.c.b16 %v1709, %v1707
    %v1752 = vpack.c.b16 %v1712, %v1710
    %v1753 = vpack.c.b16 %v1713, %v1711
    %v1754 = vpack.c.b16 %v1716, %v1714
    %v1755 = vpack.c.b16 %v1717, %v1715
    %v1756 = vpack.c.b16 %v1720, %v1718
    %v1757 = vpack.c.b16 %v1721, %v1719
    %v1758 = vpack.c.b16 %v1724, %v1722
    %v1759 = vpack.c.b16 %v1725, %v1723
    %v1760 = vpack.c.b16 %v1728, %v1726
    %v1761 = vpack.c.b16 %v1729, %v1727
    %1794 = vmatpush.bf16.msra.mxu0 %v1744
    %1795 = vmatpush.bf16.msra.mxu0 %v1742
    %1796 = vmatpush.bf16.msra.mxu0 %v1740
    %1797 = vmatpush.bf16.msra.mxu0 %v1738
    %1798 = vmatpush.bf16.msra.mxu0 %v1736
    %1799 = vmatpush.bf16.msra.mxu0 %v1734
    %1800 = vmatpush.bf16.msra.mxu0 %v1732
    %1801 = vmatpush.bf16.msra.mxu0 %v1730
    %1802 = vmatmul.bf16.gmra.mxu0 %v1598
    %v1803 = vpop.f32.mrf.mxu0
    %v1804 = vadd.f32 0.0, %v1803
    %v1805 = vpop.f32.mrf.mxu0
    %v1806 = vadd.f32 0.0, %v1805
    %1807 = vmatmul.bf16.gmra.mxu0 %v1600
    %v1808 = vpop.f32.mrf.mxu0
    %v1809 = vadd.f32 0.0, %v1808
    %v1810 = vpop.f32.mrf.mxu0
    %v1811 = vadd.f32 0.0, %v1810
    %1812 = vdwg.mxu0
    %1813 = vmatpush.bf16.msra.mxu0 %v1760
    %1814 = vmatpush.bf16.msra.mxu0 %v1758
    %1815 = vmatpush.bf16.msra.mxu0 %v1756
    %1816 = vmatpush.bf16.msra.mxu0 %v1754
    %1817 = vmatpush.bf16.msra.mxu0 %v1752
    %1818 = vmatpush.bf16.msra.mxu0 %v1750
    %1819 = vmatpush.bf16.msra.mxu0 %v1748
    %1820 = vmatpush.bf16.msra.mxu0 %v1746
    %1821 = vmatmul.bf16.gmra.mxu0 %v1599
    %v1822 = vpop.f32.mrf.mxu0
    %v1823 = vadd.f32 %v1804, %v1822
    %v1824 = vpop.f32.mrf.mxu0
    %v1825 = vadd.f32 %v1806, %v1824
    %1826 = vmatmul.bf16.gmra.mxu0 %v1601
    %v1827 = vpop.f32.mrf.mxu0
    %v1828 = vadd.f32 %v1809, %v1827
    %v1829 = vpop.f32.mrf.mxu0
    %v1830 = vadd.f32 %v1811, %v1829
    %1831 = vdwg.mxu0
    %1832 = vmatpush.bf16.msra.mxu0 %v1745
    %1833 = vmatpush.bf16.msra.mxu0 %v1743
    %1834 = vmatpush.bf16.msra.mxu0 %v1741
    %1835 = vmatpush.bf16.msra.mxu0 %v1739
    %1836 = vmatpush.bf16.msra.mxu0 %v1737
    %1837 = vmatpush.bf16.msra.mxu0 %v1735
    %1838 = vmatpush.bf16.msra.mxu0 %v1733
    %1839 = vmatpush.bf16.msra.mxu0 %v1731
    %1840 = vmatmul.bf16.gmra.mxu0 %v1598
    %v1841 = vpop.f32.mrf.mxu0
    %v1842 = vadd.f32 0.0, %v1841
    %v1843 = vpop.f32.mrf.mxu0
    %v1844 = vadd.f32 0.0, %v1843
    %1845 = vmatmul.bf16.gmra.mxu0 %v1600
    %v1846 = vpop.f32.mrf.mxu0
    %v1847 = vadd.f32 0.0, %v1846
    %v1848 = vpop.f32.mrf.mxu0
    %v1849 = vadd.f32 0.0, %v1848
    %1850 = vdwg.mxu0
    %1851 = vmatpush.bf16.msra.mxu0 %v1761
    %1852 = vmatpush.bf16.msra.mxu0 %v1759
    %1853 = vmatpush.bf16.msra.mxu0 %v1757
    %1854 = vmatpush.bf16.msra.mxu0 %v1755
    %1855 = vmatpush.bf16.msra.mxu0 %v1753
    %1856 = vmatpush.bf16.msra.mxu0 %v1751
    %1857 = vmatpush.bf16.msra.mxu0 %v1749
    %1858 = vmatpush.bf16.msra.mxu0 %v1747
    %1859 = vmatmul.bf16.gmra.mxu0 %v1599
    %v1860 = vpop.f32.mrf.mxu0
    %v1861 = vadd.f32 %v1842, %v1860
    %v1862 = vpop.f32.mrf.mxu0
    %v1863 = vadd.f32 %v1844, %v1862
    %1864 = vmatmul.bf16.gmra.mxu0 %v1601
    %v1865 = vpop.f32.mrf.mxu0
    %v1866 = vadd.f32 %v1847, %v1865
    %v1867 = vpop.f32.mrf.mxu0
    %v1868 = vadd.f32 %v1849, %v1867
    %1869 = vdwg.mxu0
    %v1870 = vadd.f32 %v1551, %v1823
    %v1871 = vadd.f32 %v1589, %v1861
    %v1872 = vadd.f32 %v1553, %v1825
    %v1873 = vadd.f32 %v1591, %v1863
    %v1874 = vadd.f32 %v1556, %v1828
    %v1875 = vadd.f32 %v1594, %v1866
    %v1876 = vadd.f32 %v1558, %v1830
    %v1877 = vadd.f32 %v1596, %v1868
    %v1878 = vld [vmem:[%s12] sm:$0x3]
    %v1880 = vperm.slane %v1878, 0
    %v1881 = vperm.slane %v1878, 1
    %v1884 = vmul.f32 %v1870, %v1880
    %v1885 = vmul.f32 %v1871, %v1881
    %v1886 = vmul.f32 %v1872, %v1880
    %v1887 = vmul.f32 %v1873, %v1881
    %v1888 = vmul.f32 %v1874, %v1880
    %v1889 = vmul.f32 %v1875, %v1881
    %v1890 = vmul.f32 %v1876, %v1880
    %v1891 = vmul.f32 %v1877, %v1881
    %v1892 = vld [vmem:[%s13] sm:$0x3]
    %v1894 = vperm.slane %v1892, 0
    %v1895 = vperm.slane %v1892, 1
    %v1898 = vadd.f32 %v1884, %v1894
    %v1899 = vadd.f32 %v1885, %v1895
    %v1900 = vadd.f32 %v1886, %v1894
    %v1901 = vadd.f32 %v1887, %v1895
    %v1902 = vadd.f32 %v1888, %v1894
    %v1903 = vadd.f32 %v1889, %v1895
    %v1904 = vadd.f32 %v1890, %v1894
    %v1905 = vadd.f32 %v1891, %v1895
    %v1906 = vmax.f32 %v1898, 0.0
    %v1907 = vmax.f32 %v1899, 0.0
    %v1908 = vmax.f32 %v1900, 0.0
    %v1909 = vmax.f32 %v1901, 0.0
    %v1910 = vmax.f32 %v1902, 0.0
    %v1911 = vmax.f32 %v1903, 0.0
    %v1912 = vmax.f32 %v1904, 0.0
    %v1913 = vmax.f32 %v1905, 0.0
    %v1914 = vpack.c.bf16 %v1907, %v1906
    %v1915 = vpack.c.bf16 %v1909, %v1908
    %v1916 = vpack.c.bf16 %v1911, %v1910
    %v1917 = vpack.c.bf16 %v1913, %v1912
    %1918 = vst [vmem:[#allocation16] sm:$0xff] %v1914
    %1919 = vst [vmem:[#allocation16 + $0x8] sm:$0xff] %v1915
    %1920 = vst [vmem:[#allocation16 + $0x10] sm:$0xff] %v1916
    %1921 = vst [vmem:[#allocation16 + $0x18] sm:$0xff] %v1917
    // Predicated region
    $region90: #{tpu_custom_call.1} parent=1 // pred_check
      _
    $region91: #{tpu_custom_call.1} parent=1 // pred_check_branch
      %1923 = sbr.rel (0) target = $region93
    $region92: #{tpu_custom_call.1} parent=1 // pred_region
      %1925 = vsyncadd [#allocation4], 0
      %s1926 = sshll.u32 [#allocation16], 4
      %s1927 = int_to_ptr.vmem [resolvable:$true] %s1926
      %s1928 = sshll.u32 %s14, 4
      %s1929 = int_to_ptr.hbm [resolvable:$true] %s1928
      %1934 = dma.vmem_to_hbm [thread:$0]  %s1927, 512, %s1929, [#allocation4], 128, 128, 8
    $region93: #{tpu_custom_call.1} parent=1 // pred_fallthru
      _
    // Predicated region
    $region94: #{tpu_custom_call.1} parent=1 // pred_check
      _
    $region95: #{tpu_custom_call.1} parent=1 // pred_check_branch
      %1936 = sbr.rel (0) target = $region97
    $region96: #{tpu_custom_call.1} parent=1 // pred_region
      %1938 = dma.done [#allocation4], 512
    $region97: #{tpu_custom_call.1} parent=1 // pred_fallthru
      _
    %1939 = vsyncpa [#allocation3], 1
    %1940 = vsyncpa [#allocation6], 1
    %1941 = vsyncpa [#allocation9], 1
    %1942 = vsyncpa [#allocation12], 1
    %1943 = vsyncpa [#allocation15], 1
    %1944 = vsyncpa [#allocation4], 1

</llo_original>
